<compile_context>
chip_gen: v6e
topology: v6e:2x2x1
jax: 0.10.0
libtpu: 0.0.40
codegen_flags: <defaults>
</compile_context>

<pallas_src>
import functools

import jax
import jax.numpy as jnp
from jax.experimental import pallas as pl
from jax.experimental.pallas import tpu as pltpu

# Preferred tile sizes (review: N tile >= 256 for the 256-wide v6e/v7x MXU, large M/K
# tiles to amortize per-grid-step overhead).  Actual tiles are capped by the problem
# dims so that no padding is ever required.
_TM, _TN, _TK = 512, 256, 512
# Explicit scoped-VMEM budget: safe on v5e (16 MiB default) / v6e / v7x (64 MiB phys);
# worst-case working set of these kernels is ~2 MiB.
_VMEM_LIMIT = 32 * 1024 * 1024


def _pick_tile(dim, pref, align):
    """Largest tile <= pref that divides `dim` (prefers multiples of `align`).

    Returning a divisor means the wrapper never pads operands / slices outputs.
    """
    if dim <= pref:
        return dim
    t = (pref // align) * align
    while t >= align:
        if dim % t == 0:
            return t
        t -= align
    for t in range(pref, 0, -1):
        if dim % t == 0:
            return t
    return dim


# ----------------------------------------------------------------------------
# Pallas kernels
# ----------------------------------------------------------------------------
def _mm_kernel(a_ref, b_ref, s_ref, bias_ref, o_ref, acc_ref, *, act):
    """Tiled bf16 matmul, f32 accumulator, fused BN scale/bias + activation epilogue."""
    @pl.when(pl.program_id(2) == 0)
    def _init():
        acc_ref[...] = jnp.zeros_like(acc_ref)

    acc_ref[...] += jnp.dot(a_ref[...], b_ref[...],
                            preferred_element_type=jnp.float32)

    @pl.when(pl.program_id(2) == pl.num_programs(2) - 1)
    def _fin():
        r = acc_ref[...] * s_ref[...] + bias_ref[...]
        if act == "relu":
            r = jnp.maximum(r, 0.0)
        elif act == "sigmoid":
            r = jax.nn.sigmoid(r)
        o_ref[...] = r.astype(o_ref.dtype)


def _conv3_kernel(x_ref, w_ref, s_ref, bias_ref, o_ref, acc_ref, *, act):
    """Direct 3x3 conv: one output row per (b, ho) grid point, the 3 height taps are
    the innermost reduction grid axis; the 3 width taps live in the K dim of the dot."""
    ki = pl.program_id(2)

    @pl.when(ki == 0)
    def _init():
        acc_ref[...] = jnp.zeros_like(acc_ref)

    a = x_ref[0, 0]                      # (Wo, 3*Cin) bf16
    w = w_ref[0]                         # (3*Cin, Cout) bf16
    acc_ref[...] += jnp.dot(a, w, preferred_element_type=jnp.float32)

    @pl.when(ki == pl.num_programs(2) - 1)
    def _fin():
        r = acc_ref[...] * s_ref[...] + bias_ref[...]
        if act == "relu":
            r = jnp.maximum(r, 0.0)
        o_ref[0, 0] = r.astype(o_ref.dtype)


def _se_kernel(h_ref, w1t_ref, w2_ref, o_ref):
    """Fused squeeze-excitation for one batch row: mean(HW) -> FC -> ReLU -> FC -> sigmoid.

    The FCs are tiny (C x C/16), so they are done with broadcast-multiply + reductions
    (no padded-to-128 matmul calls).  w1t is stored transposed: (r, C)."""
    x = h_ref[0].astype(jnp.float32)                          # (HW, C)
    m = jnp.mean(x, axis=0, keepdims=True)                    # (1, C)   squeeze
    z = jnp.sum(m * w1t_ref[...], axis=1, keepdims=True)      # (r, 1)   FC1
    z = jnp.maximum(z, 0.0)                                   # ReLU
    c = jnp.sum(z * w2_ref[...], axis=0, keepdims=True)       # (1, C)   FC2
    o_ref[0] = jax.nn.sigmoid(c).astype(o_ref.dtype)          # excitation coef


def _merge_kernel(y_ref, c_ref, side_ref, o_ref):
    """relu(y * coef + sidepath) residual merge."""
    y = y_ref[...].astype(jnp.float32)
    s = side_ref[...].astype(jnp.float32)
    o_ref[...] = jnp.maximum(y * c_ref[...] + s, 0.0).astype(o_ref.dtype)


# ----------------------------------------------------------------------------
# Pallas wrappers
# ----------------------------------------------------------------------------
@functools.partial(jax.jit, static_argnames=("act",))
def matmul_bn_act(a, b, scale, bias, act="none"):
    """(M,K) @ (K,N) * scale + bias with optional relu/sigmoid.  A/B in bf16, f32 acc."""
    M, K = a.shape
    K2, N = b.shape
    assert K == K2
    tm = _pick_tile(M, _TM, 16)
    tn = _pick_tile(N, _TN, 128)
    tk = _pick_tile(K, _TK, 128)
    assert M % tm == 0 and N % tn == 0 and K % tk == 0
    s2 = scale.reshape(1, N).astype(jnp.float32)
    b2 = bias.reshape(1, N).astype(jnp.float32)

    return pl.pallas_call(
        functools.partial(_mm_kernel, act=act),
        out_shape=jax.ShapeDtypeStruct((M, N), jnp.bfloat16),
        grid_spec=pltpu.PrefetchScalarGridSpec(
            num_scalar_prefetch=0,
            grid=(M // tm, N // tn, K // tk),
            in_specs=[
                pl.BlockSpec((tm, tk), lambda i, j, k: (i, k)),
                pl.BlockSpec((tk, tn), lambda i, j, k: (k, j)),
                # scale/bias blocks are constant in k -> fetched once per (i, j)
                pl.BlockSpec((1, tn), lambda i, j, k: (0, j)),
                pl.BlockSpec((1, tn), lambda i, j, k: (0, j)),
            ],
            out_specs=pl.BlockSpec((tm, tn), lambda i, j, k: (i, j)),
            scratch_shapes=[pltpu.VMEM((tm, tn), jnp.float32)],
        ),
        compiler_params=pltpu.CompilerParams(
            dimension_semantics=("parallel", "parallel", "arbitrary"),
            vmem_limit_bytes=_VMEM_LIMIT),
    )(a.astype(jnp.bfloat16), b.astype(jnp.bfloat16), s2, b2)


def conv1x1_bn_act(x, w, scale, bias, act="none"):
    """1x1 conv (stride handled by the caller) as a reshape + fused matmul."""
    B, H, W, Cin = x.shape
    y = matmul_bn_act(x.reshape(B * H * W, Cin), w, scale, bias, act=act)
    return y.reshape(B, H, W, -1)


@functools.partial(jax.jit, static_argnames=("stride", "act"))
def conv3x3_bn_act(x, w, scale, bias, stride=1, act="relu"):
    """3x3 conv, pad=1, fused BN + activation.  x: (B,H,W,Cin) bf16, w: (3,3,Cin,Cout)."""
    B, H, W, Cin = x.shape
    Cout = w.shape[-1]
    Ho = (H + 2 - 3) // stride + 1
    Wo = (W + 2 - 3) // stride + 1
    Hp = H + 2

    xp = jnp.pad(x, ((0, 0), (1, 1), (1, 1), (0, 0)))
    # Fold the 3 *width* taps (stride resolved) into the channel/K dim once in the
    # wrapper; the 3 *height* taps are folded into the Pallas reduction grid below,
    # so no full 9x im2col matrix is ever written to HBM.
    xw = jnp.concatenate(
        [xp[:, :, kj:kj + (Wo - 1) * stride + 1:stride, :] for kj in range(3)],
        axis=-1).astype(jnp.bfloat16)                    # (B, Hp, Wo, 3*Cin)
    wk = w.reshape(3, 3 * Cin, Cout).astype(jnp.bfloat16)  # (ki, kj*Cin, Cout)
    s2 = scale.reshape(1, Cout).astype(jnp.float32)
    b2 = bias.reshape(1, Cout).astype(jnp.float32)

    return pl.pallas_call(
        functools.partial(_conv3_kernel, act=act),
        out_shape=jax.ShapeDtypeStruct((B, Ho, Wo, Cout), jnp.bfloat16),
        grid_spec=pltpu.PrefetchScalarGridSpec(
            num_scalar_prefetch=0,
            grid=(B, Ho, 3),                             # height tap = reduction axis
            in_specs=[
                # block size 1 along H -> block index == padded row index
                pl.BlockSpec((1, 1, Wo, 3 * Cin),
                             lambda b, h, ki: (b, h * stride + ki, 0, 0)),
                pl.BlockSpec((1, 3 * Cin, Cout), lambda b, h, ki: (ki, 0, 0)),
                pl.BlockSpec((1, Cout), lambda b, h, ki: (0, 0)),
                pl.BlockSpec((1, Cout), lambda b, h, ki: (0, 0)),
            ],
            out_specs=pl.BlockSpec((1, 1, Wo, Cout), lambda b, h, ki: (b, h, 0, 0)),
            scratch_shapes=[pltpu.VMEM((Wo, Cout), jnp.float32)],
        ),
        compiler_params=pltpu.CompilerParams(
            dimension_semantics=("parallel", "parallel", "arbitrary"),
            vmem_limit_bytes=_VMEM_LIMIT),
    )(xw, wk, s2, b2)


@jax.jit
def se_coef(h, w1t, w2):
    """Squeeze-excitation coefficients.  h: (B, HW, C) bf16 -> (B, 1, C) f32."""
    B, HW, C = h.shape
    r = w1t.shape[0]
    return pl.pallas_call(
        _se_kernel,
        out_shape=jax.ShapeDtypeStruct((B, 1, C), jnp.float32),
        grid_spec=pltpu.PrefetchScalarGridSpec(
            num_scalar_prefetch=0,
            grid=(B,),
            in_specs=[
                pl.BlockSpec((1, HW, C), lambda b: (b, 0, 0)),
                pl.BlockSpec((r, C), lambda b: (0, 0)),
                pl.BlockSpec((r, C), lambda b: (0, 0)),
            ],
            out_specs=pl.BlockSpec((1, 1, C), lambda b: (b, 0, 0)),
        ),
        compiler_params=pltpu.CompilerParams(
            dimension_semantics=("parallel",),
            vmem_limit_bytes=_VMEM_LIMIT),
    )(h, w1t, w2)


@jax.jit
def se_scale_add_relu(y, coef, side):
    """relu(y * coef + side).  y/side: (B, HW, C) bf16; coef: (B, 1, C) f32."""
    B, HW, C = y.shape
    tc = _pick_tile(C, 256, 128)       # lane-dense (>=128) channel tile
    assert C % tc == 0
    return pl.pallas_call(
        _merge_kernel,
        out_shape=jax.ShapeDtypeStruct((B, HW, C), jnp.bfloat16),
        grid_spec=pltpu.PrefetchScalarGridSpec(
            num_scalar_prefetch=0,
            grid=(B, C // tc),
            in_specs=[
                pl.BlockSpec((1, HW, tc), lambda b, j: (b, 0, j)),
                pl.BlockSpec((1, 1, tc), lambda b, j: (b, 0, j)),
                pl.BlockSpec((1, HW, tc), lambda b, j: (b, 0, j)),
            ],
            out_specs=pl.BlockSpec((1, HW, tc), lambda b, j: (b, 0, j)),
        ),
        compiler_params=pltpu.CompilerParams(
            dimension_semantics=("parallel", "parallel"),
            vmem_limit_bytes=_VMEM_LIMIT),
    )(y, coef, side)


# ----------------------------------------------------------------------------
# BottleBlock: parameters + forward
# ----------------------------------------------------------------------------
def init_bottleblock_params(key, in_ch, out_ch, se_reduction=16):
    cnt = [0]

    def nk():
        cnt[0] += 1
        return jax.random.fold_in(key, cnt[0])

    def conv_w(shape, fan_in):
        w = jax.random.normal(nk(), shape, jnp.float32) * (2.0 / fan_in) ** 0.5
        return w.astype(jnp.bfloat16)   # pre-cast once at init (MXU-native operand dtype)

    def bn(c):
        # eval-mode BatchNorm folded to scale/bias (running_mean=0, running_var=1, eps=1e-5)
        gamma = jax.random.uniform(nk(), (c,), jnp.float32, 0.5, 1.0)
        beta = 0.05 * jax.random.normal(nk(), (c,), jnp.float32)
        scale = gamma / jnp.sqrt(jnp.float32(1.0 + 1e-5))
        return scale, beta

    exp = 4 * out_ch
    r = max(exp // se_reduction, 1)
    return {
        "w1": conv_w((in_ch, out_ch), in_ch),               # conv1 1x1
        "bn1": bn(out_ch),
        "w2": conv_w((3, 3, out_ch, out_ch), 9 * out_ch),   # conv2 3x3 stride
        "bn2": bn(out_ch),
        "w3": conv_w((out_ch, exp), out_ch),                 # conv3 1x1 -> 4*out_ch
        "bn3": bn(exp),
        # TODO(synk): SE class undefined in source; canonical bias-free SE weights.
        "se_w1t": jax.random.normal(nk(), (r, exp), jnp.float32) * (2.0 / exp) ** 0.5,
        "se_w2": jax.random.normal(nk(), (r, exp), jnp.float32) * (1.0 / r) ** 0.5,
        "ws": conv_w((in_ch, exp), in_ch),                   # sidepath 1x1 stride
        "bns": bn(exp),
    }


def bottleblock_forward(x, p, stride):
    """x: (B, H, W, in_ch) bf16 NHWC  ->  (B, Ho, Wo, 4*out_ch) bf16."""
    B = x.shape[0]
    # main path: conv1(1x1)+BN+ReLU -> conv2(3x3,stride)+BN+ReLU -> conv3(1x1)+BN
    h = conv1x1_bn_act(x, p["w1"], *p["bn1"], act="relu")
    h = conv3x3_bn_act(h, p["w2"], *p["bn2"], stride=stride, act="relu")
    h = conv1x1_bn_act(h, p["w3"], *p["bn3"], act="none")
    _, Ho, Wo, C = h.shape
    hf = h.reshape(B, Ho * Wo, C)

    # squeeze-excitation coefficients
    coef = se_coef(hf, p["se_w1t"], p["se_w2"])              # (B, 1, C) f32

    # projection side path (1x1 conv with stride + BN), as in the reference module
    xs = x[:, ::stride, ::stride, :] if stride > 1 else x
    side = conv1x1_bn_act(xs, p["ws"], *p["bns"], act="none")

    out = se_scale_add_relu(hf, coef, side.reshape(B, Ho * Wo, C))
    return out.reshape(B, Ho, Wo, C)


if __name__ == "__main__":
    key = jax.random.PRNGKey(0)
    B, H, W = 2, 16, 16
    in_ch, out_ch = 64, 64

    # PyTorch reference takes NCHW; kernels use NHWC + bf16 activations.
    x_nchw = jax.random.normal(jax.random.fold_in(key, 0), (B, in_ch, H, W), jnp.float32)
    x = jnp.transpose(x_nchw, (0, 2, 3, 1)).astype(jnp.bfloat16)

    # stride-2 block (downsampling projection side path) ...
    p_s2 = init_bottleblock_params(jax.random.fold_in(key, 1), in_ch, out_ch)
    y2 = bottleblock_forward(x, p_s2, stride=2)
    # ... chained into a stride-1 block (in_ch = 4*out_ch), covering both conv paths.
    p_s1 = init_bottleblock_params(jax.random.fold_in(key, 2), 4 * out_ch, out_ch)
    y1 = bottleblock_forward(y2, p_s1, stride=1)

    y2 = jax.block_until_ready(y2.astype(jnp.float32))
    y1 = jax.block_until_ready(y1.astype(jnp.float32))

    assert y2.shape == (B, H // 2, W // 2, 4 * out_ch)
    assert y1.shape == (B, H // 2, W // 2, 4 * out_ch)
    assert bool(jnp.all(jnp.isfinite(y2))) and bool(jnp.all(jnp.isfinite(y1)))
    assert bool(jnp.all(y2 >= 0)) and bool(jnp.all(y1 >= 0))   # final ReLU
    print("KERNEL_OK")
</pallas_src>

<mosaic_0001>
module attributes {stable_mosaic.version = 11 : i64} {
  func.func @_mm_kernel(%arg0: i32, %arg1: i32, %arg2: i32, %arg3: memref<512x64xbf16, #tpu.memory_space<vmem>>, %arg4: memref<64x64xbf16, #tpu.memory_space<vmem>>, %arg5: memref<1x64xf32, #tpu.memory_space<vmem>>, %arg6: memref<1x64xf32, #tpu.memory_space<vmem>>, %arg7: memref<512x64xbf16, #tpu.memory_space<vmem>>, %arg8: memref<512x64xf32, #tpu.memory_space<vmem>>) attributes {dimension_semantics = [#tpu.dimension_semantics<parallel>, #tpu.dimension_semantics<parallel>, #tpu.dimension_semantics<arbitrary>], iteration_bounds = array<i64: 1, 1, 1>, scalar_prefetch = 0 : i64, scratch_operands = 1 : i64, tpu.core_type = #tpu.core_type<tc>, window_params = [{transform_indices = @transform_0, window_bounds = array<i64: 512, 64>}, {transform_indices = @transform_1, window_bounds = array<i64: 64, 64>}, {transform_indices = @transform_2, window_bounds = array<i64: 1, 64>}, {transform_indices = @transform_3, window_bounds = array<i64: 1, 64>}, {transform_indices = @transform_4, window_bounds = array<i64: 512, 64>}]} {
    %c0_i32 = arith.constant 0 : i32
    %0 = arith.cmpi eq, %arg2, %c0_i32 : i32
    %1 = arith.extui %0 : i1 to i32
    %c0_i32_0 = arith.constant 0 : i32
    %2 = arith.cmpi ne, %1, %c0_i32_0 : i32
    scf.if %2 {
      %cst_10 = arith.constant 0.000000e+00 : f32
      %12 = vector.broadcast %cst_10 : f32 to vector<512x64xf32>
      %c0_11 = arith.constant 0 : index
      %c0_12 = arith.constant 0 : index
      %13 = vector.load %arg8[%c0_11, %c0_12] : memref<512x64xf32, #tpu.memory_space<vmem>>, vector<512x64xf32>
      tpu.vector_store %arg8[%c0_11, %c0_12], %12 {strides = array<i32>} : memref<512x64xf32, #tpu.memory_space<vmem>>, vector<512x64xf32>,
    } else {
    }
    %c0 = arith.constant 0 : index
    %c0_1 = arith.constant 0 : index
    %3 = vector.load %arg8[%c0, %c0_1] : memref<512x64xf32, #tpu.memory_space<vmem>>, vector<512x64xf32>
    %c0_2 = arith.constant 0 : index
    %c0_3 = arith.constant 0 : index
    %4 = vector.load %arg3[%c0_2, %c0_3] : memref<512x64xbf16, #tpu.memory_space<vmem>>, vector<512x64xbf16>
    %c0_4 = arith.constant 0 : index
    %c0_5 = arith.constant 0 : index
    %5 = vector.load %arg4[%c0_4, %c0_5] : memref<64x64xbf16, #tpu.memory_space<vmem>>, vector<64x64xbf16>
    %cst = arith.constant dense<0.000000e+00> : vector<512x64xf32>
    %6 = tpu.matmul %4, %5, %cst {dimension_numbers = #tpu.dot_dimension_numbers<[1], [0], [0], [1], [0, 0, 1, 1], [], []>} : vector<512x64xbf16>, vector<64x64xbf16>, vector<512x64xf32> -> vector<512x64xf32>
    %7 = arith.addf %3, %6 : vector<512x64xf32>
    %c0_6 = arith.constant 0 : index
    %c0_7 = arith.constant 0 : index
    %8 = vector.load %arg8[%c0_6, %c0_7] : memref<512x64xf32, #tpu.memory_space<vmem>>, vector<512x64xf32>
    tpu.vector_store %arg8[%c0_6, %c0_7], %7 {strides = array<i32>} : memref<512x64xf32, #tpu.memory_space<vmem>>, vector<512x64xf32>,
    %c0_i32_8 = arith.constant 0 : i32
    %9 = arith.cmpi eq, %arg2, %c0_i32_8 : i32
    %10 = arith.extui %9 : i1 to i32
    %c0_i32_9 = arith.constant 0 : i32
    %11 = arith.cmpi ne, %10, %c0_i32_9 : i32
    scf.if %11 {
      %c0_10 = arith.constant 0 : index
      %c0_11 = arith.constant 0 : index
      %12 = vector.load %arg8[%c0_10, %c0_11] : memref<512x64xf32, #tpu.memory_space<vmem>>, vector<512x64xf32>
      %c0_12 = arith.constant 0 : index
      %c0_13 = arith.constant 0 : index
      %13 = vector.load %arg5[%c0_12, %c0_13] : memref<1x64xf32, #tpu.memory_space<vmem>>, vector<1x64xf32>
      %14 = vector.broadcast %13 : vector<1x64xf32> to vector<512x64xf32>
      %15 = arith.mulf %12, %14 : vector<512x64xf32>
      %c0_14 = arith.constant 0 : index
      %c0_15 = arith.constant 0 : index
      %16 = vector.load %arg6[%c0_14, %c0_15] : memref<1x64xf32, #tpu.memory_space<vmem>>, vector<1x64xf32>
      %17 = vector.broadcast %16 : vector<1x64xf32> to vector<512x64xf32>
      %18 = arith.addf %15, %17 : vector<512x64xf32>
      %cst_16 = arith.constant 0.000000e+00 : f32
      %19 = vector.broadcast %cst_16 : f32 to vector<512x64xf32>
      %20 = arith.maximumf %18, %19 : vector<512x64xf32>
      %21 = arith.truncf %20 : vector<512x64xf32> to vector<512x64xbf16>
      %c0_17 = arith.constant 0 : index
      %c0_18 = arith.constant 0 : index
      %22 = vector.load %arg7[%c0_17, %c0_18] : memref<512x64xbf16, #tpu.memory_space<vmem>>, vector<512x64xbf16>
      tpu.vector_store %arg7[%c0_17, %c0_18], %21 {strides = array<i32>} : memref<512x64xbf16, #tpu.memory_space<vmem>>, vector<512x64xbf16>,
    } else {
    }
    return
  }
  func.func @transform_0(%arg0: i32, %arg1: i32, %arg2: i32) -> (i32, i32) {
    %c0_i32 = arith.constant 0 : i32
    return %arg0, %arg2 : i32, i32
  }
  func.func @transform_1(%arg0: i32, %arg1: i32, %arg2: i32) -> (i32, i32) {
    %c0_i32 = arith.constant 0 : i32
    return %arg2, %arg1 : i32, i32
  }
  func.func @transform_2(%arg0: i32, %arg1: i32, %arg2: i32) -> (i32, i32) {
    %c0_i32 = arith.constant 0 : i32
    %c0_i32_0 = arith.constant 0 : i32
    return %c0_i32, %arg1 : i32, i32
  }
  func.func @transform_3(%arg0: i32, %arg1: i32, %arg2: i32) -> (i32, i32) {
    %c0_i32 = arith.constant 0 : i32
    %c0_i32_0 = arith.constant 0 : i32
    return %c0_i32, %arg1 : i32, i32
  }
  func.func @transform_4(%arg0: i32, %arg1: i32, %arg2: i32) -> (i32, i32) {
    %c0_i32 = arith.constant 0 : i32
    return %arg0, %arg1 : i32, i32
  }
}

</mosaic_0001>

<llo_original>
// kernel: matmul_bn_act.1
$region0: #{matmul_bn_act.1}
  #allocation0 [shape = 'u32[]', space=smem, size = 0x4, offset = 0x4, fixed_abs, tag = 'smem constant byte address 0x4 - core index']
  #allocation1 [shape = 'u32[144,128]{1,0:T(1,128)}', space=vmem, size = 0x12000, scoped, tag = 'internal scratch']
  #allocation2 [shape = 'f32[512,64]{1,0:T(8,128)}', space=vmem, size = 0x40000, scoped, tag = 'scratch operand']
  %s0 = inlined_call_operand.vmem [shape: bf16[512,64], index: 0, kind: input, shape index: {}]
  %s1 = inlined_call_operand.vmem [shape: bf16[64,64], index: 1, kind: input, shape index: {}]
  %s2 = inlined_call_operand.vmem [shape: f32[1,64], index: 2, kind: input, shape index: {}]
  %s3 = inlined_call_operand.vmem [shape: f32[1,64], index: 3, kind: input, shape index: {}]
  %s4 = inlined_call_operand.vmem [shape: bf16[512,64], index: 4, kind: output, shape index: {}]
  %s5 = sld [smem:[#allocation0]]
  $region34: #{matmul_bn_act.1} parent=0
    _
  %s7 = ssub.s32 1, %s5
  %s8 = scalar_select 0, %s7, %s5
  // Predicated region
  $region2: #{matmul_bn_act.1} parent=0 // pred_check
    _
  $region3: #{matmul_bn_act.1} parent=0 // pred_check_branch
    %10 = sbr.rel (0) target = $region5
  $region4: #{matmul_bn_act.1} parent=0 // pred_region
    _
  $region5: #{matmul_bn_act.1} parent=0 // pred_fallthru
    _
  // Predicated region
  $region6: #{matmul_bn_act.1} parent=0 // pred_check
    _
  $region7: #{matmul_bn_act.1} parent=0 // pred_check_branch
    %12 = sbr.rel (0) target = $region9
  $region8: #{matmul_bn_act.1} parent=0 // pred_region
    _
  $region9: #{matmul_bn_act.1} parent=0 // pred_fallthru
    _
  // Predicated region
  $region10: #{matmul_bn_act.1} parent=0 // pred_check
    _
  $region11: #{matmul_bn_act.1} parent=0 // pred_check_branch
    %14 = sbr.rel (0) target = $region13
  $region12: #{matmul_bn_act.1} parent=0 // pred_region
    _
  $region13: #{matmul_bn_act.1} parent=0 // pred_fallthru
    _
  // Predicated region
  $region14: #{matmul_bn_act.1} parent=0 // pred_check
    _
  $region15: #{matmul_bn_act.1} parent=0 // pred_check_branch
    %16 = sbr.rel (0) target = $region17
  $region16: #{matmul_bn_act.1} parent=0 // pred_region
    _
  $region17: #{matmul_bn_act.1} parent=0 // pred_fallthru
    _
  %p18 = scmp.eq.s32.totalorder 0, 0
  // Predicated region
  $region18: #{matmul_bn_act.1} parent=0 // pred_check
    %p19 = pneg %p18
  $region19: #{matmul_bn_act.1} parent=0 // pred_check_branch
    %21 = sbr.rel (%p19) target = $region21
  $region20: #{matmul_bn_act.1} parent=0 // pred_region
    %vm22 = vcmask 523264
    %23 = vst.msk [vmem:[#allocation2] sm:$0xff] %vm22, 0.0
    %24 = vst.msk [vmem:[#allocation2 + $0x8] sm:$0xff] %vm22, 0.0
    %25 = vst.msk [vmem:[#allocation2 + $0x10] sm:$0xff] %vm22, 0.0
    %26 = vst.msk [vmem:[#allocation2 + $0x18] sm:$0xff] %vm22, 0.0
    %27 = vst.msk [vmem:[#allocation2 + $0x20] sm:$0xff] %vm22, 0.0
    %28 = vst.msk [vmem:[#allocation2 + $0x28] sm:$0xff] %vm22, 0.0
    %29 = vst.msk [vmem:[#allocation2 + $0x30] sm:$0xff] %vm22, 0.0
    %30 = vst.msk [vmem:[#allocation2 + $0x38] sm:$0xff] %vm22, 0.0
    %31 = vst.msk [vmem:[#allocation2 + $0x40] sm:$0xff] %vm22, 0.0
    %32 = vst.msk [vmem:[#allocation2 + $0x48] sm:$0xff] %vm22, 0.0
    %33 = vst.msk [vmem:[#allocation2 + $0x50] sm:$0xff] %vm22, 0.0
    %34 = vst.msk [vmem:[#allocation2 + $0x58] sm:$0xff] %vm22, 0.0
    %35 = vst.msk [vmem:[#allocation2 + $0x60] sm:$0xff] %vm22, 0.0
    %36 = vst.msk [vmem:[#allocation2 + $0x68] sm:$0xff] %vm22, 0.0
    %37 = vst.msk [vmem:[#allocation2 + $0x70] sm:$0xff] %vm22, 0.0
    %38 = vst.msk [vmem:[#allocation2 + $0x78] sm:$0xff] %vm22, 0.0
    %39 = vst.msk [vmem:[#allocation2 + $0x80] sm:$0xff] %vm22, 0.0
    %40 = vst.msk [vmem:[#allocation2 + $0x88] sm:$0xff] %vm22, 0.0
    %41 = vst.msk [vmem:[#allocation2 + $0x90] sm:$0xff] %vm22, 0.0
    %42 = vst.msk [vmem:[#allocation2 + $0x98] sm:$0xff] %vm22, 0.0
    %43 = vst.msk [vmem:[#allocation2 + $0xa0] sm:$0xff] %vm22, 0.0
    %44 = vst.msk [vmem:[#allocation2 + $0xa8] sm:$0xff] %vm22, 0.0
    %45 = vst.msk [vmem:[#allocation2 + $0xb0] sm:$0xff] %vm22, 0.0
    %46 = vst.msk [vmem:[#allocation2 + $0xb8] sm:$0xff] %vm22, 0.0
    %47 = vst.msk [vmem:[#allocation2 + $0xc0] sm:$0xff] %vm22, 0.0
    %48 = vst.msk [vmem:[#allocation2 + $0xc8] sm:$0xff] %vm22, 0.0
    %49 = vst.msk [vmem:[#allocation2 + $0xd0] sm:$0xff] %vm22, 0.0
    %50 = vst.msk [vmem:[#allocation2 + $0xd8] sm:$0xff] %vm22, 0.0
    %51 = vst.msk [vmem:[#allocation2 + $0xe0] sm:$0xff] %vm22, 0.0
    %52 = vst.msk [vmem:[#allocation2 + $0xe8] sm:$0xff] %vm22, 0.0
    %53 = vst.msk [vmem:[#allocation2 + $0xf0] sm:$0xff] %vm22, 0.0
    %54 = vst.msk [vmem:[#allocation2 + $0xf8] sm:$0xff] %vm22, 0.0
    %55 = vst.msk [vmem:[#allocation2 + $0x100] sm:$0xff] %vm22, 0.0
    %56 = vst.msk [vmem:[#allocation2 + $0x108] sm:$0xff] %vm22, 0.0
    %57 = vst.msk [vmem:[#allocation2 + $0x110] sm:$0xff] %vm22, 0.0
    %58 = vst.msk [vmem:[#allocation2 + $0x118] sm:$0xff] %vm22, 0.0
    %59 = vst.msk [vmem:[#allocation2 + $0x120] sm:$0xff] %vm22, 0.0
    %60 = vst.msk [vmem:[#allocation2 + $0x128] sm:$0xff] %vm22, 0.0
    %61 = vst.msk [vmem:[#allocation2 + $0x130] sm:$0xff] %vm22, 0.0
    %62 = vst.msk [vmem:[#allocation2 + $0x138] sm:$0xff] %vm22, 0.0
    %63 = vst.msk [vmem:[#allocation2 + $0x140] sm:$0xff] %vm22, 0.0
    %64 = vst.msk [vmem:[#allocation2 + $0x148] sm:$0xff] %vm22, 0.0
    %65 = vst.msk [vmem:[#allocation2 + $0x150] sm:$0xff] %vm22, 0.0
    %66 = vst.msk [vmem:[#allocation2 + $0x158] sm:$0xff] %vm22, 0.0
    %67 = vst.msk [vmem:[#allocation2 + $0x160] sm:$0xff] %vm22, 0.0
    %68 = vst.msk [vmem:[#allocation2 + $0x168] sm:$0xff] %vm22, 0.0
    %69 = vst.msk [vmem:[#allocation2 + $0x170] sm:$0xff] %vm22, 0.0
    %70 = vst.msk [vmem:[#allocation2 + $0x178] sm:$0xff] %vm22, 0.0
    %71 = vst.msk [vmem:[#allocation2 + $0x180] sm:$0xff] %vm22, 0.0
    %72 = vst.msk [vmem:[#allocation2 + $0x188] sm:$0xff] %vm22, 0.0
    %73 = vst.msk [vmem:[#allocation2 + $0x190] sm:$0xff] %vm22, 0.0
    %74 = vst.msk [vmem:[#allocation2 + $0x198] sm:$0xff] %vm22, 0.0
    %75 = vst.msk [vmem:[#allocation2 + $0x1a0] sm:$0xff] %vm22, 0.0
    %76 = vst.msk [vmem:[#allocation2 + $0x1a8] sm:$0xff] %vm22, 0.0
    %77 = vst.msk [vmem:[#allocation2 + $0x1b0] sm:$0xff] %vm22, 0.0
    %78 = vst.msk [vmem:[#allocation2 + $0x1b8] sm:$0xff] %vm22, 0.0
    %79 = vst.msk [vmem:[#allocation2 + $0x1c0] sm:$0xff] %vm22, 0.0
    %80 = vst.msk [vmem:[#allocation2 + $0x1c8] sm:$0xff] %vm22, 0.0
    %81 = vst.msk [vmem:[#allocation2 + $0x1d0] sm:$0xff] %vm22, 0.0
    %82 = vst.msk [vmem:[#allocation2 + $0x1d8] sm:$0xff] %vm22, 0.0
    %83 = vst.msk [vmem:[#allocation2 + $0x1e0] sm:$0xff] %vm22, 0.0
    %84 = vst.msk [vmem:[#allocation2 + $0x1e8] sm:$0xff] %vm22, 0.0
    %85 = vst.msk [vmem:[#allocation2 + $0x1f0] sm:$0xff] %vm22, 0.0
    %86 = vst.msk [vmem:[#allocation2 + $0x1f8] sm:$0xff] %vm22, 0.0
  $region21: #{matmul_bn_act.1} parent=0 // pred_fallthru
    _
  %v87 = vld [vmem:[#allocation2] sm:$0xff]
  %v88 = vld [vmem:[#allocation2 + $0x8] sm:$0xff]
  %v89 = vld [vmem:[#allocation2 + $0x10] sm:$0xff]
  %v90 = vld [vmem:[#allocation2 + $0x18] sm:$0xff]
  %v91 = vld [vmem:[#allocation2 + $0x20] sm:$0xff]
  %v92 = vld [vmem:[#allocation2 + $0x28] sm:$0xff]
  %v93 = vld [vmem:[#allocation2 + $0x30] sm:$0xff]
  %v94 = vld [vmem:[#allocation2 + $0x38] sm:$0xff]
  %v95 = vld [vmem:[#allocation2 + $0x40] sm:$0xff]
  %v96 = vld [vmem:[#allocation2 + $0x48] sm:$0xff]
  %v97 = vld [vmem:[#allocation2 + $0x50] sm:$0xff]
  %v98 = vld [vmem:[#allocation2 + $0x58] sm:$0xff]
  %v99 = vld [vmem:[#allocation2 + $0x60] sm:$0xff]
  %v100 = vld [vmem:[#allocation2 + $0x68] sm:$0xff]
  %v101 = vld [vmem:[#allocation2 + $0x70] sm:$0xff]
  %v102 = vld [vmem:[#allocation2 + $0x78] sm:$0xff]
  %v103 = vld [vmem:[#allocation2 + $0x80] sm:$0xff]
  %v104 = vld [vmem:[#allocation2 + $0x88] sm:$0xff]
  %v105 = vld [vmem:[#allocation2 + $0x90] sm:$0xff]
  %v106 = vld [vmem:[#allocation2 + $0x98] sm:$0xff]
  %v107 = vld [vmem:[#allocation2 + $0xa0] sm:$0xff]
  %v108 = vld [vmem:[#allocation2 + $0xa8] sm:$0xff]
  %v109 = vld [vmem:[#allocation2 + $0xb0] sm:$0xff]
  %v110 = vld [vmem:[#allocation2 + $0xb8] sm:$0xff]
  %v111 = vld [vmem:[#allocation2 + $0xc0] sm:$0xff]
  %v112 = vld [vmem:[#allocation2 + $0xc8] sm:$0xff]
  %v113 = vld [vmem:[#allocation2 + $0xd0] sm:$0xff]
  %v114 = vld [vmem:[#allocation2 + $0xd8] sm:$0xff]
  %v115 = vld [vmem:[#allocation2 + $0xe0] sm:$0xff]
  %v116 = vld [vmem:[#allocation2 + $0xe8] sm:$0xff]
  %v117 = vld [vmem:[#allocation2 + $0xf0] sm:$0xff]
  %v118 = vld [vmem:[#allocation2 + $0xf8] sm:$0xff]
  %v119 = vld [vmem:[#allocation2 + $0x100] sm:$0xff]
  %v120 = vld [vmem:[#allocation2 + $0x108] sm:$0xff]
  %v121 = vld [vmem:[#allocation2 + $0x110] sm:$0xff]
  %v122 = vld [vmem:[#allocation2 + $0x118] sm:$0xff]
  %v123 = vld [vmem:[#allocation2 + $0x120] sm:$0xff]
  %v124 = vld [vmem:[#allocation2 + $0x128] sm:$0xff]
  %v125 = vld [vmem:[#allocation2 + $0x130] sm:$0xff]
  %v126 = vld [vmem:[#allocation2 + $0x138] sm:$0xff]
  %v127 = vld [vmem:[#allocation2 + $0x140] sm:$0xff]
  %v128 = vld [vmem:[#allocation2 + $0x148] sm:$0xff]
  %v129 = vld [vmem:[#allocation2 + $0x150] sm:$0xff]
  %v130 = vld [vmem:[#allocation2 + $0x158] sm:$0xff]
  %v131 = vld [vmem:[#allocation2 + $0x160] sm:$0xff]
  %v132 = vld [vmem:[#allocation2 + $0x168] sm:$0xff]
  %v133 = vld [vmem:[#allocation2 + $0x170] sm:$0xff]
  %v134 = vld [vmem:[#allocation2 + $0x178] sm:$0xff]
  %v135 = vld [vmem:[#allocation2 + $0x180] sm:$0xff]
  %v136 = vld [vmem:[#allocation2 + $0x188] sm:$0xff]
  %v137 = vld [vmem:[#allocation2 + $0x190] sm:$0xff]
  %v138 = vld [vmem:[#allocation2 + $0x198] sm:$0xff]
  %v139 = vld [vmem:[#allocation2 + $0x1a0] sm:$0xff]
  %v140 = vld [vmem:[#allocation2 + $0x1a8] sm:$0xff]
  %v141 = vld [vmem:[#allocation2 + $0x1b0] sm:$0xff]
  %v142 = vld [vmem:[#allocation2 + $0x1b8] sm:$0xff]
  %v143 = vld [vmem:[#allocation2 + $0x1c0] sm:$0xff]
  %v144 = vld [vmem:[#allocation2 + $0x1c8] sm:$0xff]
  %v145 = vld [vmem:[#allocation2 + $0x1d0] sm:$0xff]
  %v146 = vld [vmem:[#allocation2 + $0x1d8] sm:$0xff]
  %v147 = vld [vmem:[#allocation2 + $0x1e0] sm:$0xff]
  %v148 = vld [vmem:[#allocation2 + $0x1e8] sm:$0xff]
  %v149 = vld [vmem:[#allocation2 + $0x1f0] sm:$0xff]
  %v150 = vld [vmem:[#allocation2 + $0x1f8] sm:$0xff]
  %v151 = vld [vmem:[%s0] sm:$0xf]
  %v152 = vld [vmem:[%s0 + $0x4] sm:$0xf]
  %v153 = vld [vmem:[%s0 + $0x8] sm:$0xf]
  %v154 = vld [vmem:[%s0 + $0xc] sm:$0xf]
  %v155 = vld [vmem:[%s0 + $0x10] sm:$0xf]
  %v156 = vld [vmem:[%s0 + $0x14] sm:$0xf]
  %v157 = vld [vmem:[%s0 + $0x18] sm:$0xf]
  %v158 = vld [vmem:[%s0 + $0x1c] sm:$0xf]
  %v159 = vld [vmem:[%s0 + $0x20] sm:$0xf]
  %v160 = vld [vmem:[%s0 + $0x24] sm:$0xf]
  %v161 = vld [vmem:[%s0 + $0x28] sm:$0xf]
  %v162 = vld [vmem:[%s0 + $0x2c] sm:$0xf]
  %v163 = vld [vmem:[%s0 + $0x30] sm:$0xf]
  %v164 = vld [vmem:[%s0 + $0x34] sm:$0xf]
  %v165 = vld [vmem:[%s0 + $0x38] sm:$0xf]
  %v166 = vld [vmem:[%s0 + $0x3c] sm:$0xf]
  %v167 = vld [vmem:[%s0 + $0x40] sm:$0xf]
  %v168 = vld [vmem:[%s0 + $0x44] sm:$0xf]
  %v169 = vld [vmem:[%s0 + $0x48] sm:$0xf]
  %v170 = vld [vmem:[%s0 + $0x4c] sm:$0xf]
  %v171 = vld [vmem:[%s0 + $0x50] sm:$0xf]
  %v172 = vld [vmem:[%s0 + $0x54] sm:$0xf]
  %v173 = vld [vmem:[%s0 + $0x58] sm:$0xf]
  %v174 = vld [vmem:[%s0 + $0x5c] sm:$0xf]
  %v175 = vld [vmem:[%s0 + $0x60] sm:$0xf]
  %v176 = vld [vmem:[%s0 + $0x64] sm:$0xf]
  %v177 = vld [vmem:[%s0 + $0x68] sm:$0xf]
  %v178 = vld [vmem:[%s0 + $0x6c] sm:$0xf]
  %v179 = vld [vmem:[%s0 + $0x70] sm:$0xf]
  %v180 = vld [vmem:[%s0 + $0x74] sm:$0xf]
  %v181 = vld [vmem:[%s0 + $0x78] sm:$0xf]
  %v182 = vld [vmem:[%s0 + $0x7c] sm:$0xf]
  %v183 = vld [vmem:[%s0 + $0x80] sm:$0xf]
  %v184 = vld [vmem:[%s0 + $0x84] sm:$0xf]
  %v185 = vld [vmem:[%s0 + $0x88] sm:$0xf]
  %v186 = vld [vmem:[%s0 + $0x8c] sm:$0xf]
  %v187 = vld [vmem:[%s0 + $0x90] sm:$0xf]
  %v188 = vld [vmem:[%s0 + $0x94] sm:$0xf]
  %v189 = vld [vmem:[%s0 + $0x98] sm:$0xf]
  %v190 = vld [vmem:[%s0 + $0x9c] sm:$0xf]
  %v191 = vld [vmem:[%s0 + $0xa0] sm:$0xf]
  %v192 = vld [vmem:[%s0 + $0xa4] sm:$0xf]
  %v193 = vld [vmem:[%s0 + $0xa8] sm:$0xf]
  %v194 = vld [vmem:[%s0 + $0xac] sm:$0xf]
  %v195 = vld [vmem:[%s0 + $0xb0] sm:$0xf]
  %v196 = vld [vmem:[%s0 + $0xb4] sm:$0xf]
  %v197 = vld [vmem:[%s0 + $0xb8] sm:$0xf]
  %v198 = vld [vmem:[%s0 + $0xbc] sm:$0xf]
  %v199 = vld [vmem:[%s0 + $0xc0] sm:$0xf]
  %v200 = vld [vmem:[%s0 + $0xc4] sm:$0xf]
  %v201 = vld [vmem:[%s0 + $0xc8] sm:$0xf]
  %v202 = vld [vmem:[%s0 + $0xcc] sm:$0xf]
  %v203 = vld [vmem:[%s0 + $0xd0] sm:$0xf]
  %v204 = vld [vmem:[%s0 + $0xd4] sm:$0xf]
  %v205 = vld [vmem:[%s0 + $0xd8] sm:$0xf]
  %v206 = vld [vmem:[%s0 + $0xdc] sm:$0xf]
  %v207 = vld [vmem:[%s0 + $0xe0] sm:$0xf]
  %v208 = vld [vmem:[%s0 + $0xe4] sm:$0xf]
  %v209 = vld [vmem:[%s0 + $0xe8] sm:$0xf]
  %v210 = vld [vmem:[%s0 + $0xec] sm:$0xf]
  %v211 = vld [vmem:[%s0 + $0xf0] sm:$0xf]
  %v212 = vld [vmem:[%s0 + $0xf4] sm:$0xf]
  %v213 = vld [vmem:[%s0 + $0xf8] sm:$0xf]
  %v214 = vld [vmem:[%s0 + $0xfc] sm:$0xf]
  %v215 = vld [vmem:[%s1] sm:$0xf]
  %v216 = vld [vmem:[%s1 + $0x4] sm:$0xf]
  %v217 = vld [vmem:[%s1 + $0x8] sm:$0xf]
  %v218 = vld [vmem:[%s1 + $0xc] sm:$0xf]
  %v219 = vld [vmem:[%s1 + $0x10] sm:$0xf]
  %v220 = vld [vmem:[%s1 + $0x14] sm:$0xf]
  %v221 = vld [vmem:[%s1 + $0x18] sm:$0xf]
  %v222 = vld [vmem:[%s1 + $0x1c] sm:$0xf]
  %v287 = vunpack.c.l.b16 %v151
  %v288 = vunpack.c.l.b16 %v152
  %v289 = vunpack.c.l.b16 %v153
  %v290 = vunpack.c.l.b16 %v154
  %v291 = vunpack.c.l.b16 %v155
  %v292 = vunpack.c.l.b16 %v156
  %v293 = vunpack.c.l.b16 %v157
  %v294 = vunpack.c.l.b16 %v158
  %v295 = vunpack.c.l.b16 %v159
  %v296 = vunpack.c.l.b16 %v160
  %v297 = vunpack.c.l.b16 %v161
  %v298 = vunpack.c.l.b16 %v162
  %v299 = vunpack.c.l.b16 %v163
  %v300 = vunpack.c.l.b16 %v164
  %v301 = vunpack.c.l.b16 %v165
  %v302 = vunpack.c.l.b16 %v166
  %v303 = vunpack.c.l.b16 %v167
  %v304 = vunpack.c.l.b16 %v168
  %v305 = vunpack.c.l.b16 %v169
  %v306 = vunpack.c.l.b16 %v170
  %v307 = vunpack.c.l.b16 %v171
  %v308 = vunpack.c.l.b16 %v172
  %v309 = vunpack.c.l.b16 %v173
  %v310 = vunpack.c.l.b16 %v174
  %v311 = vunpack.c.l.b16 %v175
  %v312 = vunpack.c.l.b16 %v176
  %v313 = vunpack.c.l.b16 %v177
  %v314 = vunpack.c.l.b16 %v178
  %v315 = vunpack.c.l.b16 %v179
  %v316 = vunpack.c.l.b16 %v180
  %v317 = vunpack.c.l.b16 %v181
  %v318 = vunpack.c.l.b16 %v182
  %v319 = vunpack.c.l.b16 %v183
  %v320 = vunpack.c.l.b16 %v184
  %v321 = vunpack.c.l.b16 %v185
  %v322 = vunpack.c.l.b16 %v186
  %v323 = vunpack.c.l.b16 %v187
  %v324 = vunpack.c.l.b16 %v188
  %v325 = vunpack.c.l.b16 %v189
  %v326 = vunpack.c.l.b16 %v190
  %v327 = vunpack.c.l.b16 %v191
  %v328 = vunpack.c.l.b16 %v192
  %v329 = vunpack.c.l.b16 %v193
  %v330 = vunpack.c.l.b16 %v194
  %v331 = vunpack.c.l.b16 %v195
  %v332 = vunpack.c.l.b16 %v196
  %v333 = vunpack.c.l.b16 %v197
  %v334 = vunpack.c.l.b16 %v198
  %v335 = vunpack.c.l.b16 %v199
  %v336 = vunpack.c.l.b16 %v200
  %v337 = vunpack.c.l.b16 %v201
  %v338 = vunpack.c.l.b16 %v202
  %v339 = vunpack.c.l.b16 %v203
  %v340 = vunpack.c.l.b16 %v204
  %v341 = vunpack.c.l.b16 %v205
  %v342 = vunpack.c.l.b16 %v206
  %v343 = vunpack.c.l.b16 %v207
  %v344 = vunpack.c.l.b16 %v208
  %v345 = vunpack.c.l.b16 %v209
  %v346 = vunpack.c.l.b16 %v210
  %v347 = vunpack.c.l.b16 %v211
  %v348 = vunpack.c.l.b16 %v212
  %v349 = vunpack.c.l.b16 %v213
  %v350 = vunpack.c.l.b16 %v214
  %v351 = vpack.c.b16 %v288, %v287
  %v352 = vpack.c.b16 %v290, %v289
  %v353 = vpack.c.b16 %v292, %v291
  %v354 = vpack.c.b16 %v294, %v293
  %v355 = vpack.c.b16 %v296, %v295
  %v356 = vpack.c.b16 %v298, %v297
  %v357 = vpack.c.b16 %v300, %v299
  %v358 = vpack.c.b16 %v302, %v301
  %v359 = vpack.c.b16 %v304, %v303
  %v360 = vpack.c.b16 %v306, %v305
  %v361 = vpack.c.b16 %v308, %v307
  %v362 = vpack.c.b16 %v310, %v309
  %v363 = vpack.c.b16 %v312, %v311
  %v364 = vpack.c.b16 %v314, %v313
  %v365 = vpack.c.b16 %v316, %v315
  %v366 = vpack.c.b16 %v318, %v317
  %v367 = vpack.c.b16 %v320, %v319
  %v368 = vpack.c.b16 %v322, %v321
  %v369 = vpack.c.b16 %v324, %v323
  %v370 = vpack.c.b16 %v326, %v325
  %v371 = vpack.c.b16 %v328, %v327
  %v372 = vpack.c.b16 %v330, %v329
  %v373 = vpack.c.b16 %v332, %v331
  %v374 = vpack.c.b16 %v334, %v333
  %v375 = vpack.c.b16 %v336, %v335
  %v376 = vpack.c.b16 %v338, %v337
  %v377 = vpack.c.b16 %v340, %v339
  %v378 = vpack.c.b16 %v342, %v341
  %v379 = vpack.c.b16 %v344, %v343
  %v380 = vpack.c.b16 %v346, %v345
  %v381 = vpack.c.b16 %v348, %v347
  %v382 = vpack.c.b16 %v350, %v349
  %v391 = vunpack.c.l.b16 %v215
  %v392 = vunpack.c.l.b16 %v216
  %v393 = vunpack.c.l.b16 %v217
  %v394 = vunpack.c.l.b16 %v218
  %v395 = vunpack.c.l.b16 %v219
  %v396 = vunpack.c.l.b16 %v220
  %v397 = vunpack.c.l.b16 %v221
  %v398 = vunpack.c.l.b16 %v222
  %v399 = vpack.c.b16 %v392, %v391
  %v400 = vpack.c.b16 %v394, %v393
  %v401 = vpack.c.b16 %v396, %v395
  %v402 = vpack.c.b16 %v398, %v397
  %vm407 = vcmask 523264
  %v409 = vsel %vm407, %v351, 0
  %v412 = vsel %vm407, %v352, 0
  %v415 = vsel %vm407, %v353, 0
  %v418 = vsel %vm407, %v354, 0
  %v421 = vsel %vm407, %v355, 0
  %v424 = vsel %vm407, %v356, 0
  %v427 = vsel %vm407, %v357, 0
  %v430 = vsel %vm407, %v358, 0
  %v433 = vsel %vm407, %v359, 0
  %v436 = vsel %vm407, %v360, 0
  %v439 = vsel %vm407, %v361, 0
  %v442 = vsel %vm407, %v362, 0
  %v445 = vsel %vm407, %v363, 0
  %v448 = vsel %vm407, %v364, 0
  %v451 = vsel %vm407, %v365, 0
  %v454 = vsel %vm407, %v366, 0
  %v457 = vsel %vm407, %v367, 0
  %v460 = vsel %vm407, %v368, 0
  %v463 = vsel %vm407, %v369, 0
  %v466 = vsel %vm407, %v370, 0
  %v469 = vsel %vm407, %v371, 0
  %v472 = vsel %vm407, %v372, 0
  %v475 = vsel %vm407, %v373, 0
  %v478 = vsel %vm407, %v374, 0
  %v481 = vsel %vm407, %v375, 0
  %v484 = vsel %vm407, %v376, 0
  %v487 = vsel %vm407, %v377, 0
  %v490 = vsel %vm407, %v378, 0
  %v493 = vsel %vm407, %v379, 0
  %v496 = vsel %vm407, %v380, 0
  %v499 = vsel %vm407, %v381, 0
  %v502 = vsel %vm407, %v382, 0
  %504 = vmatprep.subr.bf16.mxu0 0
  %505 = vmatpush1.bf16.msra.mxu0 0
  %506 = vmatprep.subr.bf16.mxu0 0
  %507 = vmatpush1.bf16.msra.mxu0 0
  %508 = vmatprep.subr.bf16.mxu0 0
  %509 = vmatpush1.bf16.msra.mxu0 0
  %510 = vmatprep.subr.bf16.mxu0 0
  %511 = vmatpush1.bf16.msra.mxu0 0
  %512 = vmatprep.subr.bf16.mxu0 0
  %513 = vmatpush1.bf16.msra.mxu0 %v402
  %514 = vmatprep.subr.bf16.mxu0 0
  %515 = vmatpush1.bf16.msra.mxu0 %v401
  %516 = vmatprep.subr.bf16.mxu0 0
  %517 = vmatpush1.bf16.msra.mxu0 %v400
  %518 = vmatprep.subr.bf16.mxu0 0
  %519 = vmatpush1.bf16.msra.mxu0 %v399
  %520 = vmatprep.subr.bf16.mxu0 0
  %521 = vmatpush2.bf16.msra.mxu0 0
  %522 = vmatprep.subr.bf16.mxu0 0
  %523 = vmatpush2.bf16.msra.mxu0 0
  %524 = vmatprep.subr.bf16.mxu0 0
  %525 = vmatpush2.bf16.msra.mxu0 0
  %526 = vmatprep.subr.bf16.mxu0 0
  %527 = vmatpush2.bf16.msra.mxu0 0
  %528 = vmatprep.subr.bf16.mxu0 0
  %529 = vmatpush2.bf16.msra.mxu0 0
  %530 = vmatprep.subr.bf16.mxu0 0
  %531 = vmatpush2.bf16.msra.mxu0 0
  %532 = vmatprep.subr.bf16.mxu0 0
  %533 = vmatpush2.bf16.msra.mxu0 0
  %534 = vmatprep.subr.bf16.mxu0 0
  %535 = vmatpush2.bf16.msra.mxu0 0
  %536 = vmatprep.mubr.bf16.mxu0 0
  %537 = vmatmul.mubr.bf16.gmra.mxu0 %v409
  %v538 = vpop.f32.mrf.mxu0
  %v539 = vadd.f32 0.0, %v538
  %v540 = vpop.f32.mrf.mxu0
  %v541 = vpop.f32.mrf.mxu0
  %v542 = vadd.f32 0.0, %v541
  %v543 = vpop.f32.mrf.mxu0
  %544 = vmatprep.mubr.bf16.mxu0 0
  %545 = vmatmul.mubr.bf16.gmra.mxu0 %v412
  %v546 = vpop.f32.mrf.mxu0
  %v547 = vadd.f32 0.0, %v546
  %v548 = vpop.f32.mrf.mxu0
  %v549 = vpop.f32.mrf.mxu0
  %v550 = vadd.f32 0.0, %v549
  %v551 = vpop.f32.mrf.mxu0
  %552 = vmatprep.mubr.bf16.mxu0 0
  %553 = vmatmul.mubr.bf16.gmra.mxu0 %v415
  %v554 = vpop.f32.mrf.mxu0
  %v555 = vadd.f32 0.0, %v554
  %v556 = vpop.f32.mrf.mxu0
  %v557 = vpop.f32.mrf.mxu0
  %v558 = vadd.f32 0.0, %v557
  %v559 = vpop.f32.mrf.mxu0
  %560 = vmatprep.mubr.bf16.mxu0 0
  %561 = vmatmul.mubr.bf16.gmra.mxu0 %v418
  %v562 = vpop.f32.mrf.mxu0
  %v563 = vadd.f32 0.0, %v562
  %v564 = vpop.f32.mrf.mxu0
  %v565 = vpop.f32.mrf.mxu0
  %v566 = vadd.f32 0.0, %v565
  %v567 = vpop.f32.mrf.mxu0
  %568 = vmatprep.mubr.bf16.mxu0 0
  %569 = vmatmul.mubr.bf16.gmra.mxu0 %v421
  %v570 = vpop.f32.mrf.mxu0
  %v571 = vadd.f32 0.0, %v570
  %v572 = vpop.f32.mrf.mxu0
  %v573 = vpop.f32.mrf.mxu0
  %v574 = vadd.f32 0.0, %v573
  %v575 = vpop.f32.mrf.mxu0
  %576 = vmatprep.mubr.bf16.mxu0 0
  %577 = vmatmul.mubr.bf16.gmra.mxu0 %v424
  %v578 = vpop.f32.mrf.mxu0
  %v579 = vadd.f32 0.0, %v578
  %v580 = vpop.f32.mrf.mxu0
  %v581 = vpop.f32.mrf.mxu0
  %v582 = vadd.f32 0.0, %v581
  %v583 = vpop.f32.mrf.mxu0
  %584 = vmatprep.mubr.bf16.mxu0 0
  %585 = vmatmul.mubr.bf16.gmra.mxu0 %v427
  %v586 = vpop.f32.mrf.mxu0
  %v587 = vadd.f32 0.0, %v586
  %v588 = vpop.f32.mrf.mxu0
  %v589 = vpop.f32.mrf.mxu0
  %v590 = vadd.f32 0.0, %v589
  %v591 = vpop.f32.mrf.mxu0
  %592 = vmatprep.mubr.bf16.mxu0 0
  %593 = vmatmul.mubr.bf16.gmra.mxu0 %v430
  %v594 = vpop.f32.mrf.mxu0
  %v595 = vadd.f32 0.0, %v594
  %v596 = vpop.f32.mrf.mxu0
  %v597 = vpop.f32.mrf.mxu0
  %v598 = vadd.f32 0.0, %v597
  %v599 = vpop.f32.mrf.mxu0
  %600 = vmatprep.mubr.bf16.mxu0 0
  %601 = vmatmul.mubr.bf16.gmra.mxu0 %v433
  %v602 = vpop.f32.mrf.mxu0
  %v603 = vadd.f32 0.0, %v602
  %v604 = vpop.f32.mrf.mxu0
  %v605 = vpop.f32.mrf.mxu0
  %v606 = vadd.f32 0.0, %v605
  %v607 = vpop.f32.mrf.mxu0
  %608 = vmatprep.mubr.bf16.mxu0 0
  %609 = vmatmul.mubr.bf16.gmra.mxu0 %v436
  %v610 = vpop.f32.mrf.mxu0
  %v611 = vadd.f32 0.0, %v610
  %v612 = vpop.f32.mrf.mxu0
  %v613 = vpop.f32.mrf.mxu0
  %v614 = vadd.f32 0.0, %v613
  %v615 = vpop.f32.mrf.mxu0
  %616 = vmatprep.mubr.bf16.mxu0 0
  %617 = vmatmul.mubr.bf16.gmra.mxu0 %v439
  %v618 = vpop.f32.mrf.mxu0
  %v619 = vadd.f32 0.0, %v618
  %v620 = vpop.f32.mrf.mxu0
  %v621 = vpop.f32.mrf.mxu0
  %v622 = vadd.f32 0.0, %v621
  %v623 = vpop.f32.mrf.mxu0
  %624 = vmatprep.mubr.bf16.mxu0 0
  %625 = vmatmul.mubr.bf16.gmra.mxu0 %v442
  %v626 = vpop.f32.mrf.mxu0
  %v627 = vadd.f32 0.0, %v626
  %v628 = vpop.f32.mrf.mxu0
  %v629 = vpop.f32.mrf.mxu0
  %v630 = vadd.f32 0.0, %v629
  %v631 = vpop.f32.mrf.mxu0
  %632 = vmatprep.mubr.bf16.mxu0 0
  %633 = vmatmul.mubr.bf16.gmra.mxu0 %v445
  %v634 = vpop.f32.mrf.mxu0
  %v635 = vadd.f32 0.0, %v634
  %v636 = vpop.f32.mrf.mxu0
  %v637 = vpop.f32.mrf.mxu0
  %v638 = vadd.f32 0.0, %v637
  %v639 = vpop.f32.mrf.mxu0
  %640 = vmatprep.mubr.bf16.mxu0 0
  %641 = vmatmul.mubr.bf16.gmra.mxu0 %v448
  %v642 = vpop.f32.mrf.mxu0
  %v643 = vadd.f32 0.0, %v642
  %v644 = vpop.f32.mrf.mxu0
  %v645 = vpop.f32.mrf.mxu0
  %v646 = vadd.f32 0.0, %v645
  %v647 = vpop.f32.mrf.mxu0
  %648 = vmatprep.mubr.bf16.mxu0 0
  %649 = vmatmul.mubr.bf16.gmra.mxu0 %v451
  %v650 = vpop.f32.mrf.mxu0
  %v651 = vadd.f32 0.0, %v650
  %v652 = vpop.f32.mrf.mxu0
  %v653 = vpop.f32.mrf.mxu0
  %v654 = vadd.f32 0.0, %v653
  %v655 = vpop.f32.mrf.mxu0
  %656 = vmatprep.mubr.bf16.mxu0 0
  %657 = vmatmul.mubr.bf16.gmra.mxu0 %v454
  %v658 = vpop.f32.mrf.mxu0
  %v659 = vadd.f32 0.0, %v658
  %v660 = vpop.f32.mrf.mxu0
  %v661 = vpop.f32.mrf.mxu0
  %v662 = vadd.f32 0.0, %v661
  %v663 = vpop.f32.mrf.mxu0
  %664 = vmatprep.mubr.bf16.mxu0 0
  %665 = vmatmul.mubr.bf16.gmra.mxu0 %v457
  %v666 = vpop.f32.mrf.mxu0
  %v667 = vadd.f32 0.0, %v666
  %v668 = vpop.f32.mrf.mxu0
  %v669 = vpop.f32.mrf.mxu0
  %v670 = vadd.f32 0.0, %v669
  %v671 = vpop.f32.mrf.mxu0
  %672 = vmatprep.mubr.bf16.mxu0 0
  %673 = vmatmul.mubr.bf16.gmra.mxu0 %v460
  %v674 = vpop.f32.mrf.mxu0
  %v675 = vadd.f32 0.0, %v674
  %v676 = vpop.f32.mrf.mxu0
  %v677 = vpop.f32.mrf.mxu0
  %v678 = vadd.f32 0.0, %v677
  %v679 = vpop.f32.mrf.mxu0
  %680 = vmatprep.mubr.bf16.mxu0 0
  %681 = vmatmul.mubr.bf16.gmra.mxu0 %v463
  %v682 = vpop.f32.mrf.mxu0
  %v683 = vadd.f32 0.0, %v682
  %v684 = vpop.f32.mrf.mxu0
  %v685 = vpop.f32.mrf.mxu0
  %v686 = vadd.f32 0.0, %v685
  %v687 = vpop.f32.mrf.mxu0
  %688 = vmatprep.mubr.bf16.mxu0 0
  %689 = vmatmul.mubr.bf16.gmra.mxu0 %v466
  %v690 = vpop.f32.mrf.mxu0
  %v691 = vadd.f32 0.0, %v690
  %v692 = vpop.f32.mrf.mxu0
  %v693 = vpop.f32.mrf.mxu0
  %v694 = vadd.f32 0.0, %v693
  %v695 = vpop.f32.mrf.mxu0
  %696 = vmatprep.mubr.bf16.mxu0 0
  %697 = vmatmul.mubr.bf16.gmra.mxu0 %v469
  %v698 = vpop.f32.mrf.mxu0
  %v699 = vadd.f32 0.0, %v698
  %v700 = vpop.f32.mrf.mxu0
  %v701 = vpop.f32.mrf.mxu0
  %v702 = vadd.f32 0.0, %v701
  %v703 = vpop.f32.mrf.mxu0
  %704 = vmatprep.mubr.bf16.mxu0 0
  %705 = vmatmul.mubr.bf16.gmra.mxu0 %v472
  %v706 = vpop.f32.mrf.mxu0
  %v707 = vadd.f32 0.0, %v706
  %v708 = vpop.f32.mrf.mxu0
  %v709 = vpop.f32.mrf.mxu0
  %v710 = vadd.f32 0.0, %v709
  %v711 = vpop.f32.mrf.mxu0
  %712 = vmatprep.mubr.bf16.mxu0 0
  %713 = vmatmul.mubr.bf16.gmra.mxu0 %v475
  %v714 = vpop.f32.mrf.mxu0
  %v715 = vadd.f32 0.0, %v714
  %v716 = vpop.f32.mrf.mxu0
  %v717 = vpop.f32.mrf.mxu0
  %v718 = vadd.f32 0.0, %v717
  %v719 = vpop.f32.mrf.mxu0
  %720 = vmatprep.mubr.bf16.mxu0 0
  %721 = vmatmul.mubr.bf16.gmra.mxu0 %v478
  %v722 = vpop.f32.mrf.mxu0
  %v723 = vadd.f32 0.0, %v722
  %v724 = vpop.f32.mrf.mxu0
  %v725 = vpop.f32.mrf.mxu0
  %v726 = vadd.f32 0.0, %v725
  %v727 = vpop.f32.mrf.mxu0
  %728 = vmatprep.mubr.bf16.mxu0 0
  %729 = vmatmul.mubr.bf16.gmra.mxu0 %v481
  %v730 = vpop.f32.mrf.mxu0
  %v731 = vadd.f32 0.0, %v730
  %v732 = vpop.f32.mrf.mxu0
  %v733 = vpop.f32.mrf.mxu0
  %v734 = vadd.f32 0.0, %v733
  %v735 = vpop.f32.mrf.mxu0
  %736 = vmatprep.mubr.bf16.mxu0 0
  %737 = vmatmul.mubr.bf16.gmra.mxu0 %v484
  %v738 = vpop.f32.mrf.mxu0
  %v739 = vadd.f32 0.0, %v738
  %v740 = vpop.f32.mrf.mxu0
  %v741 = vpop.f32.mrf.mxu0
  %v742 = vadd.f32 0.0, %v741
  %v743 = vpop.f32.mrf.mxu0
  %744 = vmatprep.mubr.bf16.mxu0 0
  %745 = vmatmul.mubr.bf16.gmra.mxu0 %v487
  %v746 = vpop.f32.mrf.mxu0
  %v747 = vadd.f32 0.0, %v746
  %v748 = vpop.f32.mrf.mxu0
  %v749 = vpop.f32.mrf.mxu0
  %v750 = vadd.f32 0.0, %v749
  %v751 = vpop.f32.mrf.mxu0
  %752 = vmatprep.mubr.bf16.mxu0 0
  %753 = vmatmul.mubr.bf16.gmra.mxu0 %v490
  %v754 = vpop.f32.mrf.mxu0
  %v755 = vadd.f32 0.0, %v754
  %v756 = vpop.f32.mrf.mxu0
  %v757 = vpop.f32.mrf.mxu0
  %v758 = vadd.f32 0.0, %v757
  %v759 = vpop.f32.mrf.mxu0
  %760 = vmatprep.mubr.bf16.mxu0 0
  %761 = vmatmul.mubr.bf16.gmra.mxu0 %v493
  %v762 = vpop.f32.mrf.mxu0
  %v763 = vadd.f32 0.0, %v762
  %v764 = vpop.f32.mrf.mxu0
  %v765 = vpop.f32.mrf.mxu0
  %v766 = vadd.f32 0.0, %v765
  %v767 = vpop.f32.mrf.mxu0
  %768 = vmatprep.mubr.bf16.mxu0 0
  %769 = vmatmul.mubr.bf16.gmra.mxu0 %v496
  %v770 = vpop.f32.mrf.mxu0
  %v771 = vadd.f32 0.0, %v770
  %v772 = vpop.f32.mrf.mxu0
  %v773 = vpop.f32.mrf.mxu0
  %v774 = vadd.f32 0.0, %v773
  %v775 = vpop.f32.mrf.mxu0
  %776 = vmatprep.mubr.bf16.mxu0 0
  %777 = vmatmul.mubr.bf16.gmra.mxu0 %v499
  %v778 = vpop.f32.mrf.mxu0
  %v779 = vadd.f32 0.0, %v778
  %v780 = vpop.f32.mrf.mxu0
  %v781 = vpop.f32.mrf.mxu0
  %v782 = vadd.f32 0.0, %v781
  %v783 = vpop.f32.mrf.mxu0
  %784 = vmatprep.mubr.bf16.mxu0 0
  %785 = vmatmul.mubr.bf16.gmra.mxu0 %v502
  %v786 = vpop.f32.mrf.mxu0
  %v787 = vadd.f32 0.0, %v786
  %v788 = vpop.f32.mrf.mxu0
  %v789 = vpop.f32.mrf.mxu0
  %v790 = vadd.f32 0.0, %v789
  %v791 = vpop.f32.mrf.mxu0
  %792 = vdwg.mxu0
  %v793 = vadd.f32 %v87, %v539
  %v794 = vadd.f32 %v88, %v542
  %v795 = vadd.f32 %v89, %v547
  %v796 = vadd.f32 %v90, %v550
  %v797 = vadd.f32 %v91, %v555
  %v798 = vadd.f32 %v92, %v558
  %v799 = vadd.f32 %v93, %v563
  %v800 = vadd.f32 %v94, %v566
  %v801 = vadd.f32 %v95, %v571
  %v802 = vadd.f32 %v96, %v574
  %v803 = vadd.f32 %v97, %v579
  %v804 = vadd.f32 %v98, %v582
  %v805 = vadd.f32 %v99, %v587
  %v806 = vadd.f32 %v100, %v590
  %v807 = vadd.f32 %v101, %v595
  %v808 = vadd.f32 %v102, %v598
  %v809 = vadd.f32 %v103, %v603
  %v810 = vadd.f32 %v104, %v606
  %v811 = vadd.f32 %v105, %v611
  %v812 = vadd.f32 %v106, %v614
  %v813 = vadd.f32 %v107, %v619
  %v814 = vadd.f32 %v108, %v622
  %v815 = vadd.f32 %v109, %v627
  %v816 = vadd.f32 %v110, %v630
  %v817 = vadd.f32 %v111, %v635
  %v818 = vadd.f32 %v112, %v638
  %v819 = vadd.f32 %v113, %v643
  %v820 = vadd.f32 %v114, %v646
  %v821 = vadd.f32 %v115, %v651
  %v822 = vadd.f32 %v116, %v654
  %v823 = vadd.f32 %v117, %v659
  %v824 = vadd.f32 %v118, %v662
  %v825 = vadd.f32 %v119, %v667
  %v826 = vadd.f32 %v120, %v670
  %v827 = vadd.f32 %v121, %v675
  %v828 = vadd.f32 %v122, %v678
  %v829 = vadd.f32 %v123, %v683
  %v830 = vadd.f32 %v124, %v686
  %v831 = vadd.f32 %v125, %v691
  %v832 = vadd.f32 %v126, %v694
  %v833 = vadd.f32 %v127, %v699
  %v834 = vadd.f32 %v128, %v702
  %v835 = vadd.f32 %v129, %v707
  %v836 = vadd.f32 %v130, %v710
  %v837 = vadd.f32 %v131, %v715
  %v838 = vadd.f32 %v132, %v718
  %v839 = vadd.f32 %v133, %v723
  %v840 = vadd.f32 %v134, %v726
  %v841 = vadd.f32 %v135, %v731
  %v842 = vadd.f32 %v136, %v734
  %v843 = vadd.f32 %v137, %v739
  %v844 = vadd.f32 %v138, %v742
  %v845 = vadd.f32 %v139, %v747
  %v846 = vadd.f32 %v140, %v750
  %v847 = vadd.f32 %v141, %v755
  %v848 = vadd.f32 %v142, %v758
  %v849 = vadd.f32 %v143, %v763
  %v850 = vadd.f32 %v144, %v766
  %v851 = vadd.f32 %v145, %v771
  %v852 = vadd.f32 %v146, %v774
  %v853 = vadd.f32 %v147, %v779
  %v854 = vadd.f32 %v148, %v782
  %v855 = vadd.f32 %v149, %v787
  %v856 = vadd.f32 %v150, %v790
  %857 = vst.msk [vmem:[#allocation2] sm:$0xff] %vm407, %v793
  %858 = vst.msk [vmem:[#allocation2 + $0x8] sm:$0xff] %vm407, %v794
  %859 = vst.msk [vmem:[#allocation2 + $0x10] sm:$0xff] %vm407, %v795
  %860 = vst.msk [vmem:[#allocation2 + $0x18] sm:$0xff] %vm407, %v796
  %861 = vst.msk [vmem:[#allocation2 + $0x20] sm:$0xff] %vm407, %v797
  %862 = vst.msk [vmem:[#allocation2 + $0x28] sm:$0xff] %vm407, %v798
  %863 = vst.msk [vmem:[#allocation2 + $0x30] sm:$0xff] %vm407, %v799
  %864 = vst.msk [vmem:[#allocation2 + $0x38] sm:$0xff] %vm407, %v800
  %865 = vst.msk [vmem:[#allocation2 + $0x40] sm:$0xff] %vm407, %v801
  %866 = vst.msk [vmem:[#allocation2 + $0x48] sm:$0xff] %vm407, %v802
  %867 = vst.msk [vmem:[#allocation2 + $0x50] sm:$0xff] %vm407, %v803
  %868 = vst.msk [vmem:[#allocation2 + $0x58] sm:$0xff] %vm407, %v804
  %869 = vst.msk [vmem:[#allocation2 + $0x60] sm:$0xff] %vm407, %v805
  %870 = vst.msk [vmem:[#allocation2 + $0x68] sm:$0xff] %vm407, %v806
  %871 = vst.msk [vmem:[#allocation2 + $0x70] sm:$0xff] %vm407, %v807
  %872 = vst.msk [vmem:[#allocation2 + $0x78] sm:$0xff] %vm407, %v808
  %873 = vst.msk [vmem:[#allocation2 + $0x80] sm:$0xff] %vm407, %v809
  %874 = vst.msk [vmem:[#allocation2 + $0x88] sm:$0xff] %vm407, %v810
  %875 = vst.msk [vmem:[#allocation2 + $0x90] sm:$0xff] %vm407, %v811
  %876 = vst.msk [vmem:[#allocation2 + $0x98] sm:$0xff] %vm407, %v812
  %877 = vst.msk [vmem:[#allocation2 + $0xa0] sm:$0xff] %vm407, %v813
  %878 = vst.msk [vmem:[#allocation2 + $0xa8] sm:$0xff] %vm407, %v814
  %879 = vst.msk [vmem:[#allocation2 + $0xb0] sm:$0xff] %vm407, %v815
  %880 = vst.msk [vmem:[#allocation2 + $0xb8] sm:$0xff] %vm407, %v816
  %881 = vst.msk [vmem:[#allocation2 + $0xc0] sm:$0xff] %vm407, %v817
  %882 = vst.msk [vmem:[#allocation2 + $0xc8] sm:$0xff] %vm407, %v818
  %883 = vst.msk [vmem:[#allocation2 + $0xd0] sm:$0xff] %vm407, %v819
  %884 = vst.msk [vmem:[#allocation2 + $0xd8] sm:$0xff] %vm407, %v820
  %885 = vst.msk [vmem:[#allocation2 + $0xe0] sm:$0xff] %vm407, %v821
  %886 = vst.msk [vmem:[#allocation2 + $0xe8] sm:$0xff] %vm407, %v822
  %887 = vst.msk [vmem:[#allocation2 + $0xf0] sm:$0xff] %vm407, %v823
  %888 = vst.msk [vmem:[#allocation2 + $0xf8] sm:$0xff] %vm407, %v824
  %889 = vst.msk [vmem:[#allocation2 + $0x100] sm:$0xff] %vm407, %v825
  %890 = vst.msk [vmem:[#allocation2 + $0x108] sm:$0xff] %vm407, %v826
  %891 = vst.msk [vmem:[#allocation2 + $0x110] sm:$0xff] %vm407, %v827
  %892 = vst.msk [vmem:[#allocation2 + $0x118] sm:$0xff] %vm407, %v828
  %893 = vst.msk [vmem:[#allocation2 + $0x120] sm:$0xff] %vm407, %v829
  %894 = vst.msk [vmem:[#allocation2 + $0x128] sm:$0xff] %vm407, %v830
  %895 = vst.msk [vmem:[#allocation2 + $0x130] sm:$0xff] %vm407, %v831
  %896 = vst.msk [vmem:[#allocation2 + $0x138] sm:$0xff] %vm407, %v832
  %897 = vst.msk [vmem:[#allocation2 + $0x140] sm:$0xff] %vm407, %v833
  %898 = vst.msk [vmem:[#allocation2 + $0x148] sm:$0xff] %vm407, %v834
  %899 = vst.msk [vmem:[#allocation2 + $0x150] sm:$0xff] %vm407, %v835
  %900 = vst.msk [vmem:[#allocation2 + $0x158] sm:$0xff] %vm407, %v836
  %901 = vst.msk [vmem:[#allocation2 + $0x160] sm:$0xff] %vm407, %v837
  %902 = vst.msk [vmem:[#allocation2 + $0x168] sm:$0xff] %vm407, %v838
  %903 = vst.msk [vmem:[#allocation2 + $0x170] sm:$0xff] %vm407, %v839
  %904 = vst.msk [vmem:[#allocation2 + $0x178] sm:$0xff] %vm407, %v840
  %905 = vst.msk [vmem:[#allocation2 + $0x180] sm:$0xff] %vm407, %v841
  %906 = vst.msk [vmem:[#allocation2 + $0x188] sm:$0xff] %vm407, %v842
  %907 = vst.msk [vmem:[#allocation2 + $0x190] sm:$0xff] %vm407, %v843
  %908 = vst.msk [vmem:[#allocation2 + $0x198] sm:$0xff] %vm407, %v844
  %909 = vst.msk [vmem:[#allocation2 + $0x1a0] sm:$0xff] %vm407, %v845
  %910 = vst.msk [vmem:[#allocation2 + $0x1a8] sm:$0xff] %vm407, %v846
  %911 = vst.msk [vmem:[#allocation2 + $0x1b0] sm:$0xff] %vm407, %v847
  %912 = vst.msk [vmem:[#allocation2 + $0x1b8] sm:$0xff] %vm407, %v848
  %913 = vst.msk [vmem:[#allocation2 + $0x1c0] sm:$0xff] %vm407, %v849
  %914 = vst.msk [vmem:[#allocation2 + $0x1c8] sm:$0xff] %vm407, %v850
  %915 = vst.msk [vmem:[#allocation2 + $0x1d0] sm:$0xff] %vm407, %v851
  %916 = vst.msk [vmem:[#allocation2 + $0x1d8] sm:$0xff] %vm407, %v852
  %917 = vst.msk [vmem:[#allocation2 + $0x1e0] sm:$0xff] %vm407, %v853
  %918 = vst.msk [vmem:[#allocation2 + $0x1e8] sm:$0xff] %vm407, %v854
  %919 = vst.msk [vmem:[#allocation2 + $0x1f0] sm:$0xff] %vm407, %v855
  %920 = vst.msk [vmem:[#allocation2 + $0x1f8] sm:$0xff] %vm407, %v856
  // Predicated region
  $region22: #{matmul_bn_act.1} parent=0 // pred_check
    %p921 = pneg %p18
  $region23: #{matmul_bn_act.1} parent=0 // pred_check_branch
    %923 = sbr.rel (%p921) target = $region25
  $region24: #{matmul_bn_act.1} parent=0 // pred_region
    %v924 = vld [vmem:[#allocation2] sm:$0xff]
    %v925 = vld [vmem:[#allocation2 + $0x8] sm:$0xff]
    %v926 = vld [vmem:[#allocation2 + $0x10] sm:$0xff]
    %v927 = vld [vmem:[#allocation2 + $0x18] sm:$0xff]
    %v928 = vld [vmem:[#allocation2 + $0x20] sm:$0xff]
    %v929 = vld [vmem:[#allocation2 + $0x28] sm:$0xff]
    %v930 = vld [vmem:[#allocation2 + $0x30] sm:$0xff]
    %v931 = vld [vmem:[#allocation2 + $0x38] sm:$0xff]
    %v932 = vld [vmem:[#allocation2 + $0x40] sm:$0xff]
    %v933 = vld [vmem:[#allocation2 + $0x48] sm:$0xff]
    %v934 = vld [vmem:[#allocation2 + $0x50] sm:$0xff]
    %v935 = vld [vmem:[#allocation2 + $0x58] sm:$0xff]
    %v936 = vld [vmem:[#allocation2 + $0x60] sm:$0xff]
    %v937 = vld [vmem:[#allocation2 + $0x68] sm:$0xff]
    %v938 = vld [vmem:[#allocation2 + $0x70] sm:$0xff]
    %v939 = vld [vmem:[#allocation2 + $0x78] sm:$0xff]
    %v940 = vld [vmem:[#allocation2 + $0x80] sm:$0xff]
    %v941 = vld [vmem:[#allocation2 + $0x88] sm:$0xff]
    %v942 = vld [vmem:[#allocation2 + $0x90] sm:$0xff]
    %v943 = vld [vmem:[#allocation2 + $0x98] sm:$0xff]
    %v944 = vld [vmem:[#allocation2 + $0xa0] sm:$0xff]
    %v945 = vld [vmem:[#allocation2 + $0xa8] sm:$0xff]
    %v946 = vld [vmem:[#allocation2 + $0xb0] sm:$0xff]
    %v947 = vld [vmem:[#allocation2 + $0xb8] sm:$0xff]
    %v948 = vld [vmem:[#allocation2 + $0xc0] sm:$0xff]
    %v949 = vld [vmem:[#allocation2 + $0xc8] sm:$0xff]
    %v950 = vld [vmem:[#allocation2 + $0xd0] sm:$0xff]
    %v951 = vld [vmem:[#allocation2 + $0xd8] sm:$0xff]
    %v952 = vld [vmem:[#allocation2 + $0xe0] sm:$0xff]
    %v953 = vld [vmem:[#allocation2 + $0xe8] sm:$0xff]
    %v954 = vld [vmem:[#allocation2 + $0xf0] sm:$0xff]
    %v955 = vld [vmem:[#allocation2 + $0xf8] sm:$0xff]
    %v956 = vld [vmem:[#allocation2 + $0x100] sm:$0xff]
    %v957 = vld [vmem:[#allocation2 + $0x108] sm:$0xff]
    %v958 = vld [vmem:[#allocation2 + $0x110] sm:$0xff]
    %v959 = vld [vmem:[#allocation2 + $0x118] sm:$0xff]
    %v960 = vld [vmem:[#allocation2 + $0x120] sm:$0xff]
    %v961 = vld [vmem:[#allocation2 + $0x128] sm:$0xff]
    %v962 = vld [vmem:[#allocation2 + $0x130] sm:$0xff]
    %v963 = vld [vmem:[#allocation2 + $0x138] sm:$0xff]
    %v964 = vld [vmem:[#allocation2 + $0x140] sm:$0xff]
    %v965 = vld [vmem:[#allocation2 + $0x148] sm:$0xff]
    %v966 = vld [vmem:[#allocation2 + $0x150] sm:$0xff]
    %v967 = vld [vmem:[#allocation2 + $0x158] sm:$0xff]
    %v968 = vld [vmem:[#allocation2 + $0x160] sm:$0xff]
    %v969 = vld [vmem:[#allocation2 + $0x168] sm:$0xff]
    %v970 = vld [vmem:[#allocation2 + $0x170] sm:$0xff]
    %v971 = vld [vmem:[#allocation2 + $0x178] sm:$0xff]
    %v972 = vld [vmem:[#allocation2 + $0x180] sm:$0xff]
    %v973 = vld [vmem:[#allocation2 + $0x188] sm:$0xff]
    %v974 = vld [vmem:[#allocation2 + $0x190] sm:$0xff]
    %v975 = vld [vmem:[#allocation2 + $0x198] sm:$0xff]
    %v976 = vld [vmem:[#allocation2 + $0x1a0] sm:$0xff]
    %v977 = vld [vmem:[#allocation2 + $0x1a8] sm:$0xff]
    %v978 = vld [vmem:[#allocation2 + $0x1b0] sm:$0xff]
    %v979 = vld [vmem:[#allocation2 + $0x1b8] sm:$0xff]
    %v980 = vld [vmem:[#allocation2 + $0x1c0] sm:$0xff]
    %v981 = vld [vmem:[#allocation2 + $0x1c8] sm:$0xff]
    %v982 = vld [vmem:[#allocation2 + $0x1d0] sm:$0xff]
    %v983 = vld [vmem:[#allocation2 + $0x1d8] sm:$0xff]
    %v984 = vld [vmem:[#allocation2 + $0x1e0] sm:$0xff]
    %v985 = vld [vmem:[#allocation2 + $0x1e8] sm:$0xff]
    %v986 = vld [vmem:[#allocation2 + $0x1f0] sm:$0xff]
    %v987 = vld [vmem:[#allocation2 + $0x1f8] sm:$0xff]
    %v988 = vld [vmem:[%s2] sm:$0x1]
    %v990 = vlaneseq
    %v991 = vshrl.u32 %v990, 7
    %v992 = vsub.s32 0, %v991
    %v993 = vrot.slane %v988, %v992
    %v995 = vmul.f32 %v924, %v993
    %v996 = vmul.f32 %v925, %v993
    %v997 = vmul.f32 %v926, %v993
    %v998 = vmul.f32 %v927, %v993
    %v999 = vmul.f32 %v928, %v993
    %v1000 = vmul.f32 %v929, %v993
    %v1001 = vmul.f32 %v930, %v993
    %v1002 = vmul.f32 %v931, %v993
    %v1003 = vmul.f32 %v932, %v993
    %v1004 = vmul.f32 %v933, %v993
    %v1005 = vmul.f32 %v934, %v993
    %v1006 = vmul.f32 %v935, %v993
    %v1007 = vmul.f32 %v936, %v993
    %v1008 = vmul.f32 %v937, %v993
    %v1009 = vmul.f32 %v938, %v993
    %v1010 = vmul.f32 %v939, %v993
    %v1011 = vmul.f32 %v940, %v993
    %v1012 = vmul.f32 %v941, %v993
    %v1013 = vmul.f32 %v942, %v993
    %v1014 = vmul.f32 %v943, %v993
    %v1015 = vmul.f32 %v944, %v993
    %v1016 = vmul.f32 %v945, %v993
    %v1017 = vmul.f32 %v946, %v993
    %v1018 = vmul.f32 %v947, %v993
    %v1019 = vmul.f32 %v948, %v993
    %v1020 = vmul.f32 %v949, %v993
    %v1021 = vmul.f32 %v950, %v993
    %v1022 = vmul.f32 %v951, %v993
    %v1023 = vmul.f32 %v952, %v993
    %v1024 = vmul.f32 %v953, %v993
    %v1025 = vmul.f32 %v954, %v993
    %v1026 = vmul.f32 %v955, %v993
    %v1027 = vmul.f32 %v956, %v993
    %v1028 = vmul.f32 %v957, %v993
    %v1029 = vmul.f32 %v958, %v993
    %v1030 = vmul.f32 %v959, %v993
    %v1031 = vmul.f32 %v960, %v993
    %v1032 = vmul.f32 %v961, %v993
    %v1033 = vmul.f32 %v962, %v993
    %v1034 = vmul.f32 %v963, %v993
    %v1035 = vmul.f32 %v964, %v993
    %v1036 = vmul.f32 %v965, %v993
    %v1037 = vmul.f32 %v966, %v993
    %v1038 = vmul.f32 %v967, %v993
    %v1039 = vmul.f32 %v968, %v993
    %v1040 = vmul.f32 %v969, %v993
    %v1041 = vmul.f32 %v970, %v993
    %v1042 = vmul.f32 %v971, %v993
    %v1043 = vmul.f32 %v972, %v993
    %v1044 = vmul.f32 %v973, %v993
    %v1045 = vmul.f32 %v974, %v993
    %v1046 = vmul.f32 %v975, %v993
    %v1047 = vmul.f32 %v976, %v993
    %v1048 = vmul.f32 %v977, %v993
    %v1049 = vmul.f32 %v978, %v993
    %v1050 = vmul.f32 %v979, %v993
    %v1051 = vmul.f32 %v980, %v993
    %v1052 = vmul.f32 %v981, %v993
    %v1053 = vmul.f32 %v982, %v993
    %v1054 = vmul.f32 %v983, %v993
    %v1055 = vmul.f32 %v984, %v993
    %v1056 = vmul.f32 %v985, %v993
    %v1057 = vmul.f32 %v986, %v993
    %v1058 = vmul.f32 %v987, %v993
    %v1059 = vld [vmem:[%s3] sm:$0x1]
    %v1061 = vlaneseq
    %v1062 = vshrl.u32 %v1061, 7
    %v1063 = vsub.s32 0, %v1062
    %v1064 = vrot.slane %v1059, %v1063
    %v1066 = vadd.f32 %v995, %v1064
    %v1067 = vadd.f32 %v996, %v1064
    %v1068 = vadd.f32 %v997, %v1064
    %v1069 = vadd.f32 %v998, %v1064
    %v1070 = vadd.f32 %v999, %v1064
    %v1071 = vadd.f32 %v1000, %v1064
    %v1072 = vadd.f32 %v1001, %v1064
    %v1073 = vadd.f32 %v1002, %v1064
    %v1074 = vadd.f32 %v1003, %v1064
    %v1075 = vadd.f32 %v1004, %v1064
    %v1076 = vadd.f32 %v1005, %v1064
    %v1077 = vadd.f32 %v1006, %v1064
    %v1078 = vadd.f32 %v1007, %v1064
    %v1079 = vadd.f32 %v1008, %v1064
    %v1080 = vadd.f32 %v1009, %v1064
    %v1081 = vadd.f32 %v1010, %v1064
    %v1082 = vadd.f32 %v1011, %v1064
    %v1083 = vadd.f32 %v1012, %v1064
    %v1084 = vadd.f32 %v1013, %v1064
    %v1085 = vadd.f32 %v1014, %v1064
    %v1086 = vadd.f32 %v1015, %v1064
    %v1087 = vadd.f32 %v1016, %v1064
    %v1088 = vadd.f32 %v1017, %v1064
    %v1089 = vadd.f32 %v1018, %v1064
    %v1090 = vadd.f32 %v1019, %v1064
    %v1091 = vadd.f32 %v1020, %v1064
    %v1092 = vadd.f32 %v1021, %v1064
    %v1093 = vadd.f32 %v1022, %v1064
    %v1094 = vadd.f32 %v1023, %v1064
    %v1095 = vadd.f32 %v1024, %v1064
    %v1096 = vadd.f32 %v1025, %v1064
    %v1097 = vadd.f32 %v1026, %v1064
    %v1098 = vadd.f32 %v1027, %v1064
    %v1099 = vadd.f32 %v1028, %v1064
    %v1100 = vadd.f32 %v1029, %v1064
    %v1101 = vadd.f32 %v1030, %v1064
    %v1102 = vadd.f32 %v1031, %v1064
    %v1103 = vadd.f32 %v1032, %v1064
    %v1104 = vadd.f32 %v1033, %v1064
    %v1105 = vadd.f32 %v1034, %v1064
    %v1106 = vadd.f32 %v1035, %v1064
    %v1107 = vadd.f32 %v1036, %v1064
    %v1108 = vadd.f32 %v1037, %v1064
    %v1109 = vadd.f32 %v1038, %v1064
    %v1110 = vadd.f32 %v1039, %v1064
    %v1111 = vadd.f32 %v1040, %v1064
    %v1112 = vadd.f32 %v1041, %v1064
    %v1113 = vadd.f32 %v1042, %v1064
    %v1114 = vadd.f32 %v1043, %v1064
    %v1115 = vadd.f32 %v1044, %v1064
    %v1116 = vadd.f32 %v1045, %v1064
    %v1117 = vadd.f32 %v1046, %v1064
    %v1118 = vadd.f32 %v1047, %v1064
    %v1119 = vadd.f32 %v1048, %v1064
    %v1120 = vadd.f32 %v1049, %v1064
    %v1121 = vadd.f32 %v1050, %v1064
    %v1122 = vadd.f32 %v1051, %v1064
    %v1123 = vadd.f32 %v1052, %v1064
    %v1124 = vadd.f32 %v1053, %v1064
    %v1125 = vadd.f32 %v1054, %v1064
    %v1126 = vadd.f32 %v1055, %v1064
    %v1127 = vadd.f32 %v1056, %v1064
    %v1128 = vadd.f32 %v1057, %v1064
    %v1129 = vadd.f32 %v1058, %v1064
    %v1130 = vmax.f32 %v1066, 0.0
    %v1131 = vmax.f32 %v1067, 0.0
    %v1132 = vmax.f32 %v1068, 0.0
    %v1133 = vmax.f32 %v1069, 0.0
    %v1134 = vmax.f32 %v1070, 0.0
    %v1135 = vmax.f32 %v1071, 0.0
    %v1136 = vmax.f32 %v1072, 0.0
    %v1137 = vmax.f32 %v1073, 0.0
    %v1138 = vmax.f32 %v1074, 0.0
    %v1139 = vmax.f32 %v1075, 0.0
    %v1140 = vmax.f32 %v1076, 0.0
    %v1141 = vmax.f32 %v1077, 0.0
    %v1142 = vmax.f32 %v1078, 0.0
    %v1143 = vmax.f32 %v1079, 0.0
    %v1144 = vmax.f32 %v1080, 0.0
    %v1145 = vmax.f32 %v1081, 0.0
    %v1146 = vmax.f32 %v1082, 0.0
    %v1147 = vmax.f32 %v1083, 0.0
    %v1148 = vmax.f32 %v1084, 0.0
    %v1149 = vmax.f32 %v1085, 0.0
    %v1150 = vmax.f32 %v1086, 0.0
    %v1151 = vmax.f32 %v1087, 0.0
    %v1152 = vmax.f32 %v1088, 0.0
    %v1153 = vmax.f32 %v1089, 0.0
    %v1154 = vmax.f32 %v1090, 0.0
    %v1155 = vmax.f32 %v1091, 0.0
    %v1156 = vmax.f32 %v1092, 0.0
    %v1157 = vmax.f32 %v1093, 0.0
    %v1158 = vmax.f32 %v1094, 0.0
    %v1159 = vmax.f32 %v1095, 0.0
    %v1160 = vmax.f32 %v1096, 0.0
    %v1161 = vmax.f32 %v1097, 0.0
    %v1162 = vmax.f32 %v1098, 0.0
    %v1163 = vmax.f32 %v1099, 0.0
    %v1164 = vmax.f32 %v1100, 0.0
    %v1165 = vmax.f32 %v1101, 0.0
    %v1166 = vmax.f32 %v1102, 0.0
    %v1167 = vmax.f32 %v1103, 0.0
    %v1168 = vmax.f32 %v1104, 0.0
    %v1169 = vmax.f32 %v1105, 0.0
    %v1170 = vmax.f32 %v1106, 0.0
    %v1171 = vmax.f32 %v1107, 0.0
    %v1172 = vmax.f32 %v1108, 0.0
    %v1173 = vmax.f32 %v1109, 0.0
    %v1174 = vmax.f32 %v1110, 0.0
    %v1175 = vmax.f32 %v1111, 0.0
    %v1176 = vmax.f32 %v1112, 0.0
    %v1177 = vmax.f32 %v1113, 0.0
    %v1178 = vmax.f32 %v1114, 0.0
    %v1179 = vmax.f32 %v1115, 0.0
    %v1180 = vmax.f32 %v1116, 0.0
    %v1181 = vmax.f32 %v1117, 0.0
    %v1182 = vmax.f32 %v1118, 0.0
    %v1183 = vmax.f32 %v1119, 0.0
    %v1184 = vmax.f32 %v1120, 0.0
    %v1185 = vmax.f32 %v1121, 0.0
    %v1186 = vmax.f32 %v1122, 0.0
    %v1187 = vmax.f32 %v1123, 0.0
    %v1188 = vmax.f32 %v1124, 0.0
    %v1189 = vmax.f32 %v1125, 0.0
    %v1190 = vmax.f32 %v1126, 0.0
    %v1191 = vmax.f32 %v1127, 0.0
    %v1192 = vmax.f32 %v1128, 0.0
    %v1193 = vmax.f32 %v1129, 0.0
    %v1194 = vpack.c.bf16 %v1131, %v1130
    %v1195 = vpack.c.bf16 %v1133, %v1132
    %v1196 = vpack.c.bf16 %v1135, %v1134
    %v1197 = vpack.c.bf16 %v1137, %v1136
    %v1198 = vpack.c.bf16 %v1139, %v1138
    %v1199 = vpack.c.bf16 %v1141, %v1140
    %v1200 = vpack.c.bf16 %v1143, %v1142
    %v1201 = vpack.c.bf16 %v1145, %v1144
    %v1202 = vpack.c.bf16 %v1147, %v1146
    %v1203 = vpack.c.bf16 %v1149, %v1148
    %v1204 = vpack.c.bf16 %v1151, %v1150
    %v1205 = vpack.c.bf16 %v1153, %v1152
    %v1206 = vpack.c.bf16 %v1155, %v1154
    %v1207 = vpack.c.bf16 %v1157, %v1156
    %v1208 = vpack.c.bf16 %v1159, %v1158
    %v1209 = vpack.c.bf16 %v1161, %v1160
    %v1210 = vpack.c.bf16 %v1163, %v1162
    %v1211 = vpack.c.bf16 %v1165, %v1164
    %v1212 = vpack.c.bf16 %v1167, %v1166
    %v1213 = vpack.c.bf16 %v1169, %v1168
    %v1214 = vpack.c.bf16 %v1171, %v1170
    %v1215 = vpack.c.bf16 %v1173, %v1172
    %v1216 = vpack.c.bf16 %v1175, %v1174
    %v1217 = vpack.c.bf16 %v1177, %v1176
    %v1218 = vpack.c.bf16 %v1179, %v1178
    %v1219 = vpack.c.bf16 %v1181, %v1180
    %v1220 = vpack.c.bf16 %v1183, %v1182
    %v1221 = vpack.c.bf16 %v1185, %v1184
    %v1222 = vpack.c.bf16 %v1187, %v1186
    %v1223 = vpack.c.bf16 %v1189, %v1188
    %v1224 = vpack.c.bf16 %v1191, %v1190
    %v1225 = vpack.c.bf16 %v1193, %v1192
    %v1258 = vunpack.c.l.b16 %v1194
    %v1259 = vunpack.c.h.b16 %v1194
    %v1260 = vunpack.c.l.b16 %v1195
    %v1261 = vunpack.c.h.b16 %v1195
    %v1262 = vunpack.c.l.b16 %v1196
    %v1263 = vunpack.c.h.b16 %v1196
    %v1264 = vunpack.c.l.b16 %v1197
    %v1265 = vunpack.c.h.b16 %v1197
    %v1266 = vunpack.c.l.b16 %v1198
    %v1267 = vunpack.c.h.b16 %v1198
    %v1268 = vunpack.c.l.b16 %v1199
    %v1269 = vunpack.c.h.b16 %v1199
    %v1270 = vunpack.c.l.b16 %v1200
    %v1271 = vunpack.c.h.b16 %v1200
    %v1272 = vunpack.c.l.b16 %v1201
    %v1273 = vunpack.c.h.b16 %v1201
    %v1274 = vunpack.c.l.b16 %v1202
    %v1275 = vunpack.c.h.b16 %v1202
    %v1276 = vunpack.c.l.b16 %v1203
    %v1277 = vunpack.c.h.b16 %v1203
    %v1278 = vunpack.c.l.b16 %v1204
    %v1279 = vunpack.c.h.b16 %v1204
    %v1280 = vunpack.c.l.b16 %v1205
    %v1281 = vunpack.c.h.b16 %v1205
    %v1282 = vunpack.c.l.b16 %v1206
    %v1283 = vunpack.c.h.b16 %v1206
    %v1284 = vunpack.c.l.b16 %v1207
    %v1285 = vunpack.c.h.b16 %v1207
    %v1286 = vunpack.c.l.b16 %v1208
    %v1287 = vunpack.c.h.b16 %v1208
    %v1288 = vunpack.c.l.b16 %v1209
    %v1289 = vunpack.c.h.b16 %v1209
    %v1290 = vunpack.c.l.b16 %v1210
    %v1291 = vunpack.c.h.b16 %v1210
    %v1292 = vunpack.c.l.b16 %v1211
    %v1293 = vunpack.c.h.b16 %v1211
    %v1294 = vunpack.c.l.b16 %v1212
    %v1295 = vunpack.c.h.b16 %v1212
    %v1296 = vunpack.c.l.b16 %v1213
    %v1297 = vunpack.c.h.b16 %v1213
    %v1298 = vunpack.c.l.b16 %v1214
    %v1299 = vunpack.c.h.b16 %v1214
    %v1300 = vunpack.c.l.b16 %v1215
    %v1301 = vunpack.c.h.b16 %v1215
    %v1302 = vunpack.c.l.b16 %v1216
    %v1303 = vunpack.c.h.b16 %v1216
    %v1304 = vunpack.c.l.b16 %v1217
    %v1305 = vunpack.c.h.b16 %v1217
    %v1306 = vunpack.c.l.b16 %v1218
    %v1307 = vunpack.c.h.b16 %v1218
    %v1308 = vunpack.c.l.b16 %v1219
    %v1309 = vunpack.c.h.b16 %v1219
    %v1310 = vunpack.c.l.b16 %v1220
    %v1311 = vunpack.c.h.b16 %v1220
    %v1312 = vunpack.c.l.b16 %v1221
    %v1313 = vunpack.c.h.b16 %v1221
    %v1314 = vunpack.c.l.b16 %v1222
    %v1315 = vunpack.c.h.b16 %v1222
    %v1316 = vunpack.c.l.b16 %v1223
    %v1317 = vunpack.c.h.b16 %v1223
    %v1318 = vunpack.c.l.b16 %v1224
    %v1319 = vunpack.c.h.b16 %v1224
    %v1320 = vunpack.c.l.b16 %v1225
    %v1321 = vunpack.c.h.b16 %v1225
    %v1322 = vpack.c.b16 %v1258, %v1258
    %v1323 = vpack.c.b16 %v1259, %v1259
    %v1324 = vpack.c.b16 %v1260, %v1260
    %v1325 = vpack.c.b16 %v1261, %v1261
    %v1326 = vpack.c.b16 %v1262, %v1262
    %v1327 = vpack.c.b16 %v1263, %v1263
    %v1328 = vpack.c.b16 %v1264, %v1264
    %v1329 = vpack.c.b16 %v1265, %v1265
    %v1330 = vpack.c.b16 %v1266, %v1266
    %v1331 = vpack.c.b16 %v1267, %v1267
    %v1332 = vpack.c.b16 %v1268, %v1268
    %v1333 = vpack.c.b16 %v1269, %v1269
    %v1334 = vpack.c.b16 %v1270, %v1270
    %v1335 = vpack.c.b16 %v1271, %v1271
    %v1336 = vpack.c.b16 %v1272, %v1272
    %v1337 = vpack.c.b16 %v1273, %v1273
    %v1338 = vpack.c.b16 %v1274, %v1274
    %v1339 = vpack.c.b16 %v1275, %v1275
    %v1340 = vpack.c.b16 %v1276, %v1276
    %v1341 = vpack.c.b16 %v1277, %v1277
    %v1342 = vpack.c.b16 %v1278, %v1278
    %v1343 = vpack.c.b16 %v1279, %v1279
    %v1344 = vpack.c.b16 %v1280, %v1280
    %v1345 = vpack.c.b16 %v1281, %v1281
    %v1346 = vpack.c.b16 %v1282, %v1282
    %v1347 = vpack.c.b16 %v1283, %v1283
    %v1348 = vpack.c.b16 %v1284, %v1284
    %v1349 = vpack.c.b16 %v1285, %v1285
    %v1350 = vpack.c.b16 %v1286, %v1286
    %v1351 = vpack.c.b16 %v1287, %v1287
    %v1352 = vpack.c.b16 %v1288, %v1288
    %v1353 = vpack.c.b16 %v1289, %v1289
    %v1354 = vpack.c.b16 %v1290, %v1290
    %v1355 = vpack.c.b16 %v1291, %v1291
    %v1356 = vpack.c.b16 %v1292, %v1292
    %v1357 = vpack.c.b16 %v1293, %v1293
    %v1358 = vpack.c.b16 %v1294, %v1294
    %v1359 = vpack.c.b16 %v1295, %v1295
    %v1360 = vpack.c.b16 %v1296, %v1296
    %v1361 = vpack.c.b16 %v1297, %v1297
    %v1362 = vpack.c.b16 %v1298, %v1298
    %v1363 = vpack.c.b16 %v1299, %v1299
    %v1364 = vpack.c.b16 %v1300, %v1300
    %v1365 = vpack.c.b16 %v1301, %v1301
    %v1366 = vpack.c.b16 %v1302, %v1302
    %v1367 = vpack.c.b16 %v1303, %v1303
    %v1368 = vpack.c.b16 %v1304, %v1304
    %v1369 = vpack.c.b16 %v1305, %v1305
    %v1370 = vpack.c.b16 %v1306, %v1306
    %v1371 = vpack.c.b16 %v1307, %v1307
    %v1372 = vpack.c.b16 %v1308, %v1308
    %v1373 = vpack.c.b16 %v1309, %v1309
    %v1374 = vpack.c.b16 %v1310, %v1310
    %v1375 = vpack.c.b16 %v1311, %v1311
    %v1376 = vpack.c.b16 %v1312, %v1312
    %v1377 = vpack.c.b16 %v1313, %v1313
    %v1378 = vpack.c.b16 %v1314, %v1314
    %v1379 = vpack.c.b16 %v1315, %v1315
    %v1380 = vpack.c.b16 %v1316, %v1316
    %v1381 = vpack.c.b16 %v1317, %v1317
    %v1382 = vpack.c.b16 %v1318, %v1318
    %v1383 = vpack.c.b16 %v1319, %v1319
    %v1384 = vpack.c.b16 %v1320, %v1320
    %v1385 = vpack.c.b16 %v1321, %v1321
    %vm1450 = vcmask 519168
    %1451 = vst.msk [vmem:[%s4] sm:$0xf] %vm1450, %v1322
    %1452 = vst.msk [vmem:[%s4 + $0x4] sm:$0xf] %vm1450, %v1323
    %1453 = vst.msk [vmem:[%s4 + $0x8] sm:$0xf] %vm1450, %v1324
    %1454 = vst.msk [vmem:[%s4 + $0xc] sm:$0xf] %vm1450, %v1325
    %1455 = vst.msk [vmem:[%s4 + $0x10] sm:$0xf] %vm1450, %v1326
    %1456 = vst.msk [vmem:[%s4 + $0x14] sm:$0xf] %vm1450, %v1327
    %1457 = vst.msk [vmem:[%s4 + $0x18] sm:$0xf] %vm1450, %v1328
    %1458 = vst.msk [vmem:[%s4 + $0x1c] sm:$0xf] %vm1450, %v1329
    %1459 = vst.msk [vmem:[%s4 + $0x20] sm:$0xf] %vm1450, %v1330
    %1460 = vst.msk [vmem:[%s4 + $0x24] sm:$0xf] %vm1450, %v1331
    %1461 = vst.msk [vmem:[%s4 + $0x28] sm:$0xf] %vm1450, %v1332
    %1462 = vst.msk [vmem:[%s4 + $0x2c] sm:$0xf] %vm1450, %v1333
    %1463 = vst.msk [vmem:[%s4 + $0x30] sm:$0xf] %vm1450, %v1334
    %1464 = vst.msk [vmem:[%s4 + $0x34] sm:$0xf] %vm1450, %v1335
    %1465 = vst.msk [vmem:[%s4 + $0x38] sm:$0xf] %vm1450, %v1336
    %1466 = vst.msk [vmem:[%s4 + $0x3c] sm:$0xf] %vm1450, %v1337
    %1467 = vst.msk [vmem:[%s4 + $0x40] sm:$0xf] %vm1450, %v1338
    %1468 = vst.msk [vmem:[%s4 + $0x44] sm:$0xf] %vm1450, %v1339
    %1469 = vst.msk [vmem:[%s4 + $0x48] sm:$0xf] %vm1450, %v1340
    %1470 = vst.msk [vmem:[%s4 + $0x4c] sm:$0xf] %vm1450, %v1341
    %1471 = vst.msk [vmem:[%s4 + $0x50] sm:$0xf] %vm1450, %v1342
    %1472 = vst.msk [vmem:[%s4 + $0x54] sm:$0xf] %vm1450, %v1343
    %1473 = vst.msk [vmem:[%s4 + $0x58] sm:$0xf] %vm1450, %v1344
    %1474 = vst.msk [vmem:[%s4 + $0x5c] sm:$0xf] %vm1450, %v1345
    %1475 = vst.msk [vmem:[%s4 + $0x60] sm:$0xf] %vm1450, %v1346
    %1476 = vst.msk [vmem:[%s4 + $0x64] sm:$0xf] %vm1450, %v1347
    %1477 = vst.msk [vmem:[%s4 + $0x68] sm:$0xf] %vm1450, %v1348
    %1478 = vst.msk [vmem:[%s4 + $0x6c] sm:$0xf] %vm1450, %v1349
    %1479 = vst.msk [vmem:[%s4 + $0x70] sm:$0xf] %vm1450, %v1350
    %1480 = vst.msk [vmem:[%s4 + $0x74] sm:$0xf] %vm1450, %v1351
    %1481 = vst.msk [vmem:[%s4 + $0x78] sm:$0xf] %vm1450, %v1352
    %1482 = vst.msk [vmem:[%s4 + $0x7c] sm:$0xf] %vm1450, %v1353
    %1483 = vst.msk [vmem:[%s4 + $0x80] sm:$0xf] %vm1450, %v1354
    %1484 = vst.msk [vmem:[%s4 + $0x84] sm:$0xf] %vm1450, %v1355
    %1485 = vst.msk [vmem:[%s4 + $0x88] sm:$0xf] %vm1450, %v1356
    %1486 = vst.msk [vmem:[%s4 + $0x8c] sm:$0xf] %vm1450, %v1357
    %1487 = vst.msk [vmem:[%s4 + $0x90] sm:$0xf] %vm1450, %v1358
    %1488 = vst.msk [vmem:[%s4 + $0x94] sm:$0xf] %vm1450, %v1359
    %1489 = vst.msk [vmem:[%s4 + $0x98] sm:$0xf] %vm1450, %v1360
    %1490 = vst.msk [vmem:[%s4 + $0x9c] sm:$0xf] %vm1450, %v1361
    %1491 = vst.msk [vmem:[%s4 + $0xa0] sm:$0xf] %vm1450, %v1362
    %1492 = vst.msk [vmem:[%s4 + $0xa4] sm:$0xf] %vm1450, %v1363
    %1493 = vst.msk [vmem:[%s4 + $0xa8] sm:$0xf] %vm1450, %v1364
    %1494 = vst.msk [vmem:[%s4 + $0xac] sm:$0xf] %vm1450, %v1365
    %1495 = vst.msk [vmem:[%s4 + $0xb0] sm:$0xf] %vm1450, %v1366
    %1496 = vst.msk [vmem:[%s4 + $0xb4] sm:$0xf] %vm1450, %v1367
    %1497 = vst.msk [vmem:[%s4 + $0xb8] sm:$0xf] %vm1450, %v1368
    %1498 = vst.msk [vmem:[%s4 + $0xbc] sm:$0xf] %vm1450, %v1369
    %1499 = vst.msk [vmem:[%s4 + $0xc0] sm:$0xf] %vm1450, %v1370
    %1500 = vst.msk [vmem:[%s4 + $0xc4] sm:$0xf] %vm1450, %v1371
    %1501 = vst.msk [vmem:[%s4 + $0xc8] sm:$0xf] %vm1450, %v1372
    %1502 = vst.msk [vmem:[%s4 + $0xcc] sm:$0xf] %vm1450, %v1373
    %1503 = vst.msk [vmem:[%s4 + $0xd0] sm:$0xf] %vm1450, %v1374
    %1504 = vst.msk [vmem:[%s4 + $0xd4] sm:$0xf] %vm1450, %v1375
    %1505 = vst.msk [vmem:[%s4 + $0xd8] sm:$0xf] %vm1450, %v1376
    %1506 = vst.msk [vmem:[%s4 + $0xdc] sm:$0xf] %vm1450, %v1377
    %1507 = vst.msk [vmem:[%s4 + $0xe0] sm:$0xf] %vm1450, %v1378
    %1508 = vst.msk [vmem:[%s4 + $0xe4] sm:$0xf] %vm1450, %v1379
    %1509 = vst.msk [vmem:[%s4 + $0xe8] sm:$0xf] %vm1450, %v1380
    %1510 = vst.msk [vmem:[%s4 + $0xec] sm:$0xf] %vm1450, %v1381
    %1511 = vst.msk [vmem:[%s4 + $0xf0] sm:$0xf] %vm1450, %v1382
    %1512 = vst.msk [vmem:[%s4 + $0xf4] sm:$0xf] %vm1450, %v1383
    %1513 = vst.msk [vmem:[%s4 + $0xf8] sm:$0xf] %vm1450, %v1384
    %1514 = vst.msk [vmem:[%s4 + $0xfc] sm:$0xf] %vm1450, %v1385
  $region25: #{matmul_bn_act.1} parent=0 // pred_fallthru
    _
  // Predicated region
  $region26: #{matmul_bn_act.1} parent=0 // pred_check
    _
  $region27: #{matmul_bn_act.1} parent=0 // pred_check_branch
    %1516 = sbr.rel (0) target = $region29
  $region28: #{matmul_bn_act.1} parent=0 // pred_region
    _
  $region29: #{matmul_bn_act.1} parent=0 // pred_fallthru
    _
  // Predicated region
  $region30: #{matmul_bn_act.1} parent=0 // pred_check
    _
  $region31: #{matmul_bn_act.1} parent=0 // pred_check_branch
    %1518 = sbr.rel (0) target = $region33
  $region32: #{matmul_bn_act.1} parent=0 // pred_region
    _
  $region33: #{matmul_bn_act.1} parent=0 // pred_fallthru
    _

</llo_original>
